<compile_context>
chip_gen: v5e
topology: v5e:2x2
jax: 0.10.0
libtpu: 0.0.40
codegen_flags: <defaults>
</compile_context>

<pallas_src>
import jax
import jax.numpy as jnp
from jax.experimental import pallas as pl
from jax.experimental.pallas import tpu as pltpu

# ----- model hyper-parameters (from params.model_params) -----
IMAGE_DH = 32          # model_params.image_Dh
ODOM_DH = 32           # model_params.odom_Dh
KNOT_START = 0
KNOT_END = 12
NUM_CONTROL_PTS = KNOT_END - KNOT_START - 4   # = 8
HIDDEN = 256           # fc1/fc2/fc3 width (hard-coded in the module)
OUT_DIM = NUM_CONTROL_PTS * 3                 # = 24
OUT_PAD = 128          # lane-dense padded output width

LEAKY_SLOPE = 0.01     # F.leaky_relu default negative_slope


def _leaky_relu(x):
    # max(x, a*x) == leaky_relu(x) for 0 < a < 1 (one vmul + one vmax).
    return jnp.maximum(x, LEAKY_SLOPE * x)


def _round_up(x, m):
    return ((x + m - 1) // m) * m


# --------------------------------------------------------------------------------------
# Kernel
# --------------------------------------------------------------------------------------
def model_forward_kernel(
    img_ref,       # [bm, C*H*W]       bf16
    odom_ref,      # [bm, 9]           f32  (concat of goal, lin_vel, ang_vel)
    w_enc_ref,     # [C*H*W, IMAGE_DH] bf16 (synthetic encoder; bias folded into biases[0])
    w1_img_ref,    # [IMAGE_DH, 256]   bf16 (image block of fc1)
    w_odom_ref,    # [9, 256]          f32  (fc_goal/fc_lin/fc_ang folded into fc1)
    bias_ref,      # [4, 256]          f32  rows: fused fc1 bias, b2, b3, b4 (zero-padded)
    w2_ref,        # [256, 256]        bf16
    w3_ref,        # [256, 256]        bf16
    w4_ref,        # [256, OUT_PAD]    bf16 (zero-padded beyond OUT_DIM)
    out_ref,       # [bm, OUT_PAD]     f32
):
    f32 = jnp.float32
    bf16 = jnp.bfloat16

    # encoder (synthetic linear): bf16 x bf16 -> f32 on the MXU (bias folded away).
    image_h = jnp.dot(img_ref[...], w_enc_ref[...], preferred_element_type=f32)

    # fc1 applied to concat([image_h, goal_h, lin_h, ang_h]); the odom Linears are folded
    # offline into a single [9,256] weight + fused bias (exact algebra).
    h = (
        jnp.dot(image_h.astype(bf16), w1_img_ref[...], preferred_element_type=f32)
        + jnp.dot(odom_ref[...], w_odom_ref[...], preferred_element_type=f32)
        + bias_ref[0:1, :]
    )
    h = _leaky_relu(h).astype(bf16)
    h = _leaky_relu(
        jnp.dot(h, w2_ref[...], preferred_element_type=f32) + bias_ref[1:2, :]
    ).astype(bf16)
    h = _leaky_relu(
        jnp.dot(h, w3_ref[...], preferred_element_type=f32) + bias_ref[2:3, :]
    ).astype(bf16)
    out = jnp.dot(h, w4_ref[...], preferred_element_type=f32) + bias_ref[3:4, :OUT_PAD]
    out_ref[...] = out.astype(out_ref.dtype)


# --------------------------------------------------------------------------------------
# Wrapper
# --------------------------------------------------------------------------------------
def model_forward(image, goal, lin_vel, ang_vel, kp):
    """image: [B, C, H, W]; goal/lin_vel/ang_vel: [B, 3]. Returns [B, NCP, 3] f32."""
    b = image.shape[0]
    img_flat = image.reshape(b, -1).astype(jnp.bfloat16)            # bf16 DMA + MXU path
    chw = img_flat.shape[1]
    odom = jnp.concatenate([goal, lin_vel, ang_vel], axis=-1).astype(jnp.float32)  # [B, 9]

    # Batch blocking:
    #  - tiny batches: one block (block dims == full array dims, no (8,128) issue)
    #  - 16..256: >=2 grid steps so "parallel" can use both v7x TensorCores, bm % 8 == 0
    #  - large batches: 128-row blocks
    if b < 16:
        bm = b
    elif b <= 256:
        bm = _round_up(pl.cdiv(b, 2), 8)
    else:
        bm = 128
    grid = (pl.cdiv(b, bm),)
    batch_map = lambda i: (i, 0)
    fixed_map = lambda i: (0, 0)    # weights: same block every grid step

    flops = 2 * b * (chw * IMAGE_DH + 9 * HIDDEN + IMAGE_DH * HIDDEN
                     + 2 * HIDDEN * HIDDEN + HIDDEN * OUT_PAD)
    bytes_accessed = (
        (chw * IMAGE_DH + IMAGE_DH * HIDDEN + 2 * HIDDEN * HIDDEN + HIDDEN * OUT_PAD) * 2
        + (9 * HIDDEN + 4 * HIDDEN) * 4
        + b * (chw * 2 + 9 * 4 + OUT_PAD * 4)
    )

    out = pl.pallas_call(
        model_forward_kernel,
        out_shape=jax.ShapeDtypeStruct((b, OUT_PAD), jnp.float32),
        grid=grid,
        in_specs=[
            pl.BlockSpec((bm, chw), batch_map),
            pl.BlockSpec((bm, 9), batch_map),
            pl.BlockSpec((chw, IMAGE_DH), fixed_map),
            pl.BlockSpec((IMAGE_DH, HIDDEN), fixed_map),
            pl.BlockSpec((9, HIDDEN), fixed_map),
            pl.BlockSpec((4, HIDDEN), fixed_map),
            pl.BlockSpec((HIDDEN, HIDDEN), fixed_map),
            pl.BlockSpec((HIDDEN, HIDDEN), fixed_map),
            pl.BlockSpec((HIDDEN, OUT_PAD), fixed_map),
        ],
        out_specs=pl.BlockSpec((bm, OUT_PAD), batch_map),
        compiler_params=pltpu.CompilerParams(dimension_semantics=("parallel",)),
        cost_estimate=pl.CostEstimate(
            flops=flops, transcendentals=0, bytes_accessed=bytes_accessed),
    )(img_flat, odom, kp["w_enc"], kp["w1_img"], kp["w_odom"], kp["biases"],
      kp["w2"], kp["w3"], kp["w4"])
    return out[:, :OUT_DIM].reshape(b, NUM_CONTROL_PTS, 3)


# --------------------------------------------------------------------------------------
# Parameter init (PyTorch-Linear-style), folding/packing, and references
# --------------------------------------------------------------------------------------
def init_raw_params(key, in_flat):
    """Deterministic Linear-style init (uniform +/-1/sqrt(fan_in)), [in, out] layout."""
    def linear(k, fan_in, fan_out):
        k1, k2 = jax.random.split(k)
        bound = 1.0 / jnp.sqrt(jnp.float32(fan_in))
        w = jax.random.uniform(k1, (fan_in, fan_out), jnp.float32, -bound, bound)
        bvec = jax.random.uniform(k2, (1, fan_out), jnp.float32, -bound, bound)
        return w, bvec

    keys = jax.random.split(key, 8)
    p = {}
    p["w_enc"], p["b_enc"] = linear(keys[0], in_flat, IMAGE_DH)
    p["wg"], p["bg"] = linear(keys[1], 3, ODOM_DH)
    p["wl"], p["bl"] = linear(keys[2], 3, ODOM_DH)
    p["wa"], p["ba"] = linear(keys[3], 3, ODOM_DH)
    p["w1"], p["b1"] = linear(keys[4], IMAGE_DH + 3 * ODOM_DH, HIDDEN)
    p["w2"], p["b2"] = linear(keys[5], HIDDEN, HIDDEN)
    p["w3"], p["b3"] = linear(keys[6], HIDDEN, HIDDEN)
    p["w4"], p["b4"] = linear(keys[7], HIDDEN, OUT_DIM)
    return p


def pack_params(p):
    """Fold odom branches + all biases into fc1, pack biases, cast big weights to bf16,
    lane-pad fc4 to OUT_PAD columns."""
    bf16, f32 = jnp.bfloat16, jnp.float32
    w1 = p["w1"]
    w1_img = w1[:IMAGE_DH, :]
    w1_g = w1[IMAGE_DH:IMAGE_DH + ODOM_DH, :]
    w1_l = w1[IMAGE_DH + ODOM_DH:IMAGE_DH + 2 * ODOM_DH, :]
    w1_a = w1[IMAGE_DH + 2 * ODOM_DH:IMAGE_DH + 3 * ODOM_DH, :]

    # (goal @ Wg + bg) @ W1_g  ==  goal @ (Wg @ W1_g) + bg @ W1_g  (exact algebra)
    w_odom = jnp.concatenate(
        [p["wg"] @ w1_g, p["wl"] @ w1_l, p["wa"] @ w1_a], axis=0)          # [9, 256]
    b1_fused = (p["b1"] + p["b_enc"] @ w1_img + p["bg"] @ w1_g
                + p["bl"] @ w1_l + p["ba"] @ w1_a)                          # [1, 256]
    b4_pad = jnp.zeros((1, HIDDEN), f32).at[:, :OUT_DIM].set(p["b4"])
    biases = jnp.concatenate([b1_fused, p["b2"], p["b3"], b4_pad], axis=0)  # [4, 256]

    w4_pad = jnp.zeros((HIDDEN, OUT_PAD), f32).at[:, :OUT_DIM].set(p["w4"])  # [256, 128]

    # TODO(synk): generation-dispatched int8 (v5e/v6e) / fp8 (v7x) weight quantization with
    # per-channel scales would further halve weight HBM traffic; kept portable bf16 here.
    return {
        "w_enc": p["w_enc"].astype(bf16),
        "w1_img": w1_img.astype(bf16),
        "w_odom": w_odom.astype(f32),
        "biases": biases.astype(f32),
        "w2": p["w2"].astype(bf16),
        "w3": p["w3"].astype(bf16),
        "w4": w4_pad.astype(bf16),
    }


def reference_raw(image, goal, lin_vel, ang_vel, p):
    """Pure-JAX f32 reference mirroring the PyTorch forward exactly."""
    b = image.shape[0]
    x = image.reshape(b, -1)
    image_h = x @ p["w_enc"] + p["b_enc"]
    goal_h = goal @ p["wg"] + p["bg"]
    lin_h = lin_vel @ p["wl"] + p["bl"]
    ang_h = ang_vel @ p["wa"] + p["ba"]
    h = jnp.concatenate([image_h, goal_h, lin_h, ang_h], axis=-1)
    h = _leaky_relu(h @ p["w1"] + p["b1"])
    h = _leaky_relu(h @ p["w2"] + p["b2"])
    h = _leaky_relu(h @ p["w3"] + p["b3"])
    out = h @ p["w4"] + p["b4"]
    return out.reshape(b, NUM_CONTROL_PTS, 3)


def reference_packed(image, goal, lin_vel, ang_vel, kp):
    """Pure-JAX reference of the folded / bf16 math the kernel implements."""
    bf16, f32 = jnp.bfloat16, jnp.float32
    b = image.shape[0]
    x = image.reshape(b, -1).astype(bf16)
    odom = jnp.concatenate([goal, lin_vel, ang_vel], axis=-1).astype(f32)
    image_h = jnp.dot(x, kp["w_enc"], preferred_element_type=f32)
    h = (jnp.dot(image_h.astype(bf16), kp["w1_img"], preferred_element_type=f32)
         + odom @ kp["w_odom"] + kp["biases"][0:1])
    h = _leaky_relu(h).astype(bf16)
    h = _leaky_relu(jnp.dot(h, kp["w2"], preferred_element_type=f32)
                    + kp["biases"][1:2]).astype(bf16)
    h = _leaky_relu(jnp.dot(h, kp["w3"], preferred_element_type=f32)
                    + kp["biases"][2:3]).astype(bf16)
    out = jnp.dot(h, kp["w4"], preferred_element_type=f32) + kp["biases"][3:4, :OUT_PAD]
    return out[:, :OUT_DIM].reshape(b, NUM_CONTROL_PTS, 3)


# --------------------------------------------------------------------------------------
if __name__ == "__main__":
    B, C, H, W = 2, 4, 16, 16
    key = jax.random.PRNGKey(0)
    k_img, k_goal, k_lin, k_ang, k_param = jax.random.split(key, 5)

    image = jax.random.normal(k_img, (B, C, H, W), jnp.float32)
    goal = jax.random.normal(k_goal, (B, 3), jnp.float32)
    lin_vel = jax.random.normal(k_lin, (B, 3), jnp.float32)
    ang_vel = jax.random.normal(k_ang, (B, 3), jnp.float32)

    raw = init_raw_params(k_param, C * H * W)
    packed = pack_params(raw)

    out = model_forward(image, goal, lin_vel, ang_vel, packed)
    out = jax.block_until_ready(out)
    assert out.shape == (B, NUM_CONTROL_PTS, 3)

    # 1) Kernel matches the folded/bf16 math it implements (tight-ish).
    ref_p = reference_packed(image, goal, lin_vel, ang_vel, packed)
    assert jnp.allclose(out, ref_p, atol=5e-2, rtol=5e-2)

    # 2) Quantization sanity vs. the exact f32 PyTorch-equivalent forward (loose, bf16
    #    weights + bf16 activation carries).
    ref_f = reference_raw(image, goal, lin_vel, ang_vel, raw)
    assert jnp.allclose(out, ref_f, atol=2e-1, rtol=2e-1)

    print("KERNEL_OK")
</pallas_src>

<mosaic_0001>
module attributes {stable_mosaic.version = 11 : i64} {
  func.func @model_forward_kernel(%arg0: i32, %arg1: memref<2x1024xbf16, #tpu.memory_space<vmem>>, %arg2: memref<2x9xf32, #tpu.memory_space<vmem>>, %arg3: memref<1024x32xbf16, #tpu.memory_space<vmem>>, %arg4: memref<32x256xbf16, #tpu.memory_space<vmem>>, %arg5: memref<9x256xf32, #tpu.memory_space<vmem>>, %arg6: memref<4x256xf32, #tpu.memory_space<vmem>>, %arg7: memref<256x256xbf16, #tpu.memory_space<vmem>>, %arg8: memref<256x256xbf16, #tpu.memory_space<vmem>>, %arg9: memref<256x128xbf16, #tpu.memory_space<vmem>>, %arg10: memref<2x128xf32, #tpu.memory_space<vmem>>) attributes {dimension_semantics = [#tpu.dimension_semantics<parallel>], iteration_bounds = array<i64: 1>, scalar_prefetch = 0 : i64, scratch_operands = 0 : i64, tpu.core_type = #tpu.core_type<tc>, window_params = [{transform_indices = @transform_0, window_bounds = array<i64: 2, 1024>}, {transform_indices = @transform_1, window_bounds = array<i64: 2, 9>}, {pipeline_mode = #tpu.pipeline_mode<synchronous>, transform_indices = @transform_2, window_bounds = array<i64: 1024, 32>}, {pipeline_mode = #tpu.pipeline_mode<synchronous>, transform_indices = @transform_3, window_bounds = array<i64: 32, 256>}, {pipeline_mode = #tpu.pipeline_mode<synchronous>, transform_indices = @transform_4, window_bounds = array<i64: 9, 256>}, {pipeline_mode = #tpu.pipeline_mode<synchronous>, transform_indices = @transform_5, window_bounds = array<i64: 4, 256>}, {pipeline_mode = #tpu.pipeline_mode<synchronous>, transform_indices = @transform_6, window_bounds = array<i64: 256, 256>}, {pipeline_mode = #tpu.pipeline_mode<synchronous>, transform_indices = @transform_7, window_bounds = array<i64: 256, 256>}, {pipeline_mode = #tpu.pipeline_mode<synchronous>, transform_indices = @transform_8, window_bounds = array<i64: 256, 128>}, {transform_indices = @transform_9, window_bounds = array<i64: 2, 128>}]} {
    %c0 = arith.constant 0 : index
    %c0_0 = arith.constant 0 : index
    %0 = vector.load %arg1[%c0, %c0_0] : memref<2x1024xbf16, #tpu.memory_space<vmem>>, vector<2x1024xbf16>
    %c0_1 = arith.constant 0 : index
    %c0_2 = arith.constant 0 : index
    %1 = vector.load %arg3[%c0_1, %c0_2] : memref<1024x32xbf16, #tpu.memory_space<vmem>>, vector<1024x32xbf16>
    %cst = arith.constant dense<0.000000e+00> : vector<2x32xf32>
    %2 = tpu.matmul %0, %1, %cst {dimension_numbers = #tpu.dot_dimension_numbers<[1], [0], [0], [1], [0, 0, 1, 1], [], []>} : vector<2x1024xbf16>, vector<1024x32xbf16>, vector<2x32xf32> -> vector<2x32xf32>
    %3 = arith.truncf %2 : vector<2x32xf32> to vector<2x32xbf16>
    %c0_3 = arith.constant 0 : index
    %c0_4 = arith.constant 0 : index
    %4 = vector.load %arg4[%c0_3, %c0_4] : memref<32x256xbf16, #tpu.memory_space<vmem>>, vector<32x256xbf16>
    %cst_5 = arith.constant dense<0.000000e+00> : vector<2x256xf32>
    %5 = tpu.matmul %3, %4, %cst_5 {dimension_numbers = #tpu.dot_dimension_numbers<[1], [0], [0], [1], [0, 0, 1, 1], [], []>} : vector<2x32xbf16>, vector<32x256xbf16>, vector<2x256xf32> -> vector<2x256xf32>
    %c0_6 = arith.constant 0 : index
    %c0_7 = arith.constant 0 : index
    %6 = vector.load %arg2[%c0_6, %c0_7] : memref<2x9xf32, #tpu.memory_space<vmem>>, vector<2x9xf32>
    %c0_8 = arith.constant 0 : index
    %c0_9 = arith.constant 0 : index
    %7 = vector.load %arg5[%c0_8, %c0_9] : memref<9x256xf32, #tpu.memory_space<vmem>>, vector<9x256xf32>
    %cst_10 = arith.constant dense<0.000000e+00> : vector<2x256xf32>
    %8 = tpu.matmul %6, %7, %cst_10 {dimension_numbers = #tpu.dot_dimension_numbers<[1], [0], [0], [1], [0, 0, 1, 1], [], []>} : vector<2x9xf32>, vector<9x256xf32>, vector<2x256xf32> -> vector<2x256xf32>
    %9 = arith.addf %5, %8 : vector<2x256xf32>
    %c0_11 = arith.constant 0 : index
    %c0_12 = arith.constant 0 : index
    %10 = vector.load %arg6[%c0_11, %c0_12] : memref<4x256xf32, #tpu.memory_space<vmem>>, vector<1x256xf32>
    %11 = vector.broadcast %10 : vector<1x256xf32> to vector<2x256xf32>
    %12 = arith.addf %9, %11 : vector<2x256xf32>
    %cst_13 = arith.constant 0.00999999977 : f32
    %13 = vector.broadcast %cst_13 : f32 to vector<2x256xf32>
    %14 = arith.mulf %13, %12 : vector<2x256xf32>
    %15 = arith.maximumf %12, %14 : vector<2x256xf32>
    %16 = arith.truncf %15 : vector<2x256xf32> to vector<2x256xbf16>
    %c0_14 = arith.constant 0 : index
    %c0_15 = arith.constant 0 : index
    %17 = vector.load %arg7[%c0_14, %c0_15] : memref<256x256xbf16, #tpu.memory_space<vmem>>, vector<256x256xbf16>
    %cst_16 = arith.constant dense<0.000000e+00> : vector<2x256xf32>
    %18 = tpu.matmul %16, %17, %cst_16 {dimension_numbers = #tpu.dot_dimension_numbers<[1], [0], [0], [1], [0, 0, 1, 1], [], []>} : vector<2x256xbf16>, vector<256x256xbf16>, vector<2x256xf32> -> vector<2x256xf32>
    %c1 = arith.constant 1 : index
    %c0_17 = arith.constant 0 : index
    %19 = vector.load %arg6[%c1, %c0_17] : memref<4x256xf32, #tpu.memory_space<vmem>>, vector<1x256xf32>
    %20 = vector.broadcast %19 : vector<1x256xf32> to vector<2x256xf32>
    %21 = arith.addf %18, %20 : vector<2x256xf32>
    %cst_18 = arith.constant 0.00999999977 : f32
    %22 = vector.broadcast %cst_18 : f32 to vector<2x256xf32>
    %23 = arith.mulf %22, %21 : vector<2x256xf32>
    %24 = arith.maximumf %21, %23 : vector<2x256xf32>
    %25 = arith.truncf %24 : vector<2x256xf32> to vector<2x256xbf16>
    %c0_19 = arith.constant 0 : index
    %c0_20 = arith.constant 0 : index
    %26 = vector.load %arg8[%c0_19, %c0_20] : memref<256x256xbf16, #tpu.memory_space<vmem>>, vector<256x256xbf16>
    %cst_21 = arith.constant dense<0.000000e+00> : vector<2x256xf32>
    %27 = tpu.matmul %25, %26, %cst_21 {dimension_numbers = #tpu.dot_dimension_numbers<[1], [0], [0], [1], [0, 0, 1, 1], [], []>} : vector<2x256xbf16>, vector<256x256xbf16>, vector<2x256xf32> -> vector<2x256xf32>
    %c2 = arith.constant 2 : index
    %c0_22 = arith.constant 0 : index
    %28 = vector.load %arg6[%c2, %c0_22] : memref<4x256xf32, #tpu.memory_space<vmem>>, vector<1x256xf32>
    %29 = vector.broadcast %28 : vector<1x256xf32> to vector<2x256xf32>
    %30 = arith.addf %27, %29 : vector<2x256xf32>
    %cst_23 = arith.constant 0.00999999977 : f32
    %31 = vector.broadcast %cst_23 : f32 to vector<2x256xf32>
    %32 = arith.mulf %31, %30 : vector<2x256xf32>
    %33 = arith.maximumf %30, %32 : vector<2x256xf32>
    %34 = arith.truncf %33 : vector<2x256xf32> to vector<2x256xbf16>
    %c0_24 = arith.constant 0 : index
    %c0_25 = arith.constant 0 : index
    %35 = vector.load %arg9[%c0_24, %c0_25] : memref<256x128xbf16, #tpu.memory_space<vmem>>, vector<256x128xbf16>
    %cst_26 = arith.constant dense<0.000000e+00> : vector<2x128xf32>
    %36 = tpu.matmul %34, %35, %cst_26 {dimension_numbers = #tpu.dot_dimension_numbers<[1], [0], [0], [1], [0, 0, 1, 1], [], []>} : vector<2x256xbf16>, vector<256x128xbf16>, vector<2x128xf32> -> vector<2x128xf32>
    %c3 = arith.constant 3 : index
    %c0_27 = arith.constant 0 : index
    %37 = vector.load %arg6[%c3, %c0_27] : memref<4x256xf32, #tpu.memory_space<vmem>>, vector<1x128xf32>
    %38 = vector.broadcast %37 : vector<1x128xf32> to vector<2x128xf32>
    %39 = arith.addf %36, %38 : vector<2x128xf32>
    %c0_28 = arith.constant 0 : index
    %c0_29 = arith.constant 0 : index
    %40 = vector.load %arg10[%c0_28, %c0_29] : memref<2x128xf32, #tpu.memory_space<vmem>>, vector<2x128xf32>
    tpu.vector_store %arg10[%c0_28, %c0_29], %39 {strides = array<i32>} : memref<2x128xf32, #tpu.memory_space<vmem>>, vector<2x128xf32>,
    return
  }
  func.func @transform_0(%arg0: i32) -> (i32, i32) {
    %c0_i32 = arith.constant 0 : i32
    %c0_i32_0 = arith.constant 0 : i32
    return %arg0, %c0_i32 : i32, i32
  }
  func.func @transform_1(%arg0: i32) -> (i32, i32) {
    %c0_i32 = arith.constant 0 : i32
    %c0_i32_0 = arith.constant 0 : i32
    return %arg0, %c0_i32 : i32, i32
  }
  func.func @transform_2(%arg0: i32) -> (i32, i32) {
    %c0_i32 = arith.constant 0 : i32
    %c0_i32_0 = arith.constant 0 : i32
    %c0_i32_1 = arith.constant 0 : i32
    return %c0_i32, %c0_i32_0 : i32, i32
  }
  func.func @transform_3(%arg0: i32) -> (i32, i32) {
    %c0_i32 = arith.constant 0 : i32
    %c0_i32_0 = arith.constant 0 : i32
    %c0_i32_1 = arith.constant 0 : i32
    return %c0_i32, %c0_i32_0 : i32, i32
  }
  func.func @transform_4(%arg0: i32) -> (i32, i32) {
    %c0_i32 = arith.constant 0 : i32
    %c0_i32_0 = arith.constant 0 : i32
    %c0_i32_1 = arith.constant 0 : i32
    return %c0_i32, %c0_i32_0 : i32, i32
  }
  func.func @transform_5(%arg0: i32) -> (i32, i32) {
    %c0_i32 = arith.constant 0 : i32
    %c0_i32_0 = arith.constant 0 : i32
    %c0_i32_1 = arith.constant 0 : i32
    return %c0_i32, %c0_i32_0 : i32, i32
  }
  func.func @transform_6(%arg0: i32) -> (i32, i32) {
    %c0_i32 = arith.constant 0 : i32
    %c0_i32_0 = arith.constant 0 : i32
    %c0_i32_1 = arith.constant 0 : i32
    return %c0_i32, %c0_i32_0 : i32, i32
  }
  func.func @transform_7(%arg0: i32) -> (i32, i32) {
    %c0_i32 = arith.constant 0 : i32
    %c0_i32_0 = arith.constant 0 : i32
    %c0_i32_1 = arith.constant 0 : i32
    return %c0_i32, %c0_i32_0 : i32, i32
  }
  func.func @transform_8(%arg0: i32) -> (i32, i32) {
    %c0_i32 = arith.constant 0 : i32
    %c0_i32_0 = arith.constant 0 : i32
    %c0_i32_1 = arith.constant 0 : i32
    return %c0_i32, %c0_i32_0 : i32, i32
  }
  func.func @transform_9(%arg0: i32) -> (i32, i32) {
    %c0_i32 = arith.constant 0 : i32
    %c0_i32_0 = arith.constant 0 : i32
    return %arg0, %c0_i32 : i32, i32
  }
}

</mosaic_0001>

<llo_original>
// kernel: tpu_custom_call.1
$region0: #{tpu_custom_call.1}
  #allocation0 [shape = 'u32[]', space=smem, size = 0x4, offset = 0x4, fixed_abs, tag = 'smem constant byte address 0x4 - core index']
  #allocation1 [shape = 'u32[72,128]{1,0:T(1,128)}', space=vmem, size = 0x9000, scoped, tag = 'internal scratch']
  %s0 = inlined_call_operand.hbm [shape: bf16[2,1024], index: 0, kind: input, shape index: {}]
  %s1 = inlined_call_operand.hbm [shape: f32[2,9], index: 1, kind: input, shape index: {}]
  %s2 = inlined_call_operand.vmem [shape: bf16[1024,32], index: 2, kind: input, shape index: {}]
  %s3 = inlined_call_operand.hbm [shape: bf16[32,256], index: 3, kind: input, shape index: {}]
  %s4 = inlined_call_operand.hbm [shape: f32[9,256], index: 4, kind: input, shape index: {}]
  %s5 = inlined_call_operand.hbm [shape: f32[4,256], index: 5, kind: input, shape index: {}]
  %s6 = inlined_call_operand.vmem [shape: bf16[256,256], index: 6, kind: input, shape index: {}]
  %s7 = inlined_call_operand.vmem [shape: bf16[256,256], index: 7, kind: input, shape index: {}]
  %s8 = inlined_call_operand.vmem [shape: bf16[256,128], index: 8, kind: input, shape index: {}]
  %s9 = inlined_call_operand.hbm [shape: f32[2,128], index: 9, kind: output, shape index: {}]
  %s10 = sld [smem:[#allocation0]]
  $region66: #{tpu_custom_call.1} parent=0
    _
  %s12 = ssub.s32 1, %s10
  %s13 = scalar_select 0, %s12, %s10
  $region1: #{tpu_custom_call.1} parent=0
    #allocation2 [shape = 'u8[4096]{0}', space=vmem, size = 0x1000, scoped, tag = 'input window, operand 0, single buffered']
    #allocation3 [shape = 's32[1]{0}', space=sflag, size = 0x4, scoped, tag = 'scoped memory for tpu_custom_call.1']
    #allocation4 [shape = 's32[1]{0}', space=sflag, size = 0x4, scoped, tag = 'scoped memory for tpu_custom_call.1']
    #allocation5 [shape = 'u8[1024]{0}', space=vmem, size = 0x400, scoped, tag = 'input window, operand 1, single buffered']
    #allocation6 [shape = 's32[1]{0}', space=sflag, size = 0x4, scoped, tag = 'scoped memory for tpu_custom_call.1']
    #allocation7 [shape = 'u8[16384]{0}', space=vmem, size = 0x4000, scoped, tag = 'input window, operand 3, single buffered']
    #allocation8 [shape = 'u8[16384]{0}', space=vmem, size = 0x4000, scoped, tag = 'input window, operand 4, single buffered']
    #allocation9 [shape = 's32[1]{0}', space=sflag, size = 0x4, scoped, tag = 'scoped memory for tpu_custom_call.1']
    #allocation10 [shape = 'u8[4096]{0}', space=vmem, size = 0x1000, scoped, tag = 'input window, operand 5, single buffered']
    #allocation11 [shape = 'u8[1024]{0}', space=vmem, size = 0x400, scoped, tag = 'output window, operand 0, single buffered']
    %14 = vsyncpa [#allocation3], 0
    %15 = vsyncpa [#allocation6], 0
    %16 = vsyncpa [#allocation9], 0
    %17 = vsyncpa [#allocation4], 0
    // Predicated region
    $region2: #{tpu_custom_call.1} parent=1 // pred_check
      _
    $region3: #{tpu_custom_call.1} parent=1 // pred_check_branch
      %19 = sbr.rel (0) target = $region5
    $region4: #{tpu_custom_call.1} parent=1 // pred_region
      %21 = vsyncadd [#allocation3], 0
      %s23 = sshll.u32 %s0, 4
      %s24 = int_to_ptr.hbm [resolvable:$true] %s23
      %s25 = sshll.u32 [#allocation2], 4
      %s26 = int_to_ptr.vmem [resolvable:$true] %s25
      %28 = dma.hbm_to_vmem [thread:$0]  %s24, 128, %s26, [#allocation3]
    $region5: #{tpu_custom_call.1} parent=1 // pred_fallthru
      _
    // Predicated region
    $region6: #{tpu_custom_call.1} parent=1 // pred_check
      _
    $region7: #{tpu_custom_call.1} parent=1 // pred_check_branch
      %30 = sbr.rel (0) target = $region9
    $region8: #{tpu_custom_call.1} parent=1 // pred_region
      %32 = vsyncadd [#allocation6], 0
      %s34 = sshll.u32 %s1, 4
      %s35 = int_to_ptr.hbm [resolvable:$true] %s34
      %s36 = sshll.u32 [#allocation5], 4
      %s37 = int_to_ptr.vmem [resolvable:$true] %s36
      %39 = dma.hbm_to_vmem [thread:$0]  %s35, 32, %s37, [#allocation6]
    $region9: #{tpu_custom_call.1} parent=1 // pred_fallthru
      _
    // Predicated region
    $region10: #{tpu_custom_call.1} parent=1 // pred_check
      _
    $region11: #{tpu_custom_call.1} parent=1 // pred_check_branch
      %41 = sbr.rel (0) target = $region13
    $region12: #{tpu_custom_call.1} parent=1 // pred_region
      _
    $region13: #{tpu_custom_call.1} parent=1 // pred_fallthru
      _
    // Predicated region
    $region14: #{tpu_custom_call.1} parent=1 // pred_check
      _
    $region15: #{tpu_custom_call.1} parent=1 // pred_check_branch
      %43 = sbr.rel (0) target = $region17
    $region16: #{tpu_custom_call.1} parent=1 // pred_region
      %45 = vsyncadd [#allocation6], 0
      %s46 = sshll.u32 %s3, 4
      %s47 = int_to_ptr.hbm [resolvable:$true] %s46
      %s48 = sshll.u32 [#allocation7], 4
      %s49 = int_to_ptr.vmem [resolvable:$true] %s48
      %54 = dma.hbm_to_vmem [thread:$0]  %s47, 512, %s49, [#allocation6], 128, 128, 8
    $region17: #{tpu_custom_call.1} parent=1 // pred_fallthru
      _
    // Predicated region
    $region18: #{tpu_custom_call.1} parent=1 // pred_check
      _
    $region19: #{tpu_custom_call.1} parent=1 // pred_check_branch
      %56 = sbr.rel (0) target = $region21
    $region20: #{tpu_custom_call.1} parent=1 // pred_region
      %58 = vsyncadd [#allocation9], 0
      %s59 = sshll.u32 %s4, 4
      %s60 = int_to_ptr.hbm [resolvable:$true] %s59
      %s61 = sshll.u32 [#allocation8], 4
      %s62 = int_to_ptr.vmem [resolvable:$true] %s61
      %67 = dma.hbm_to_vmem [thread:$0]  %s60, 512, %s62, [#allocation9], 256, 256, 16
    $region21: #{tpu_custom_call.1} parent=1 // pred_fallthru
      _
    // Predicated region
    $region22: #{tpu_custom_call.1} parent=1 // pred_check
      _
    $region23: #{tpu_custom_call.1} parent=1 // pred_check_branch
      %69 = sbr.rel (0) target = $region25
    $region24: #{tpu_custom_call.1} parent=1 // pred_region
      %71 = vsyncadd [#allocation9], 0
      %s73 = sshll.u32 %s5, 4
      %s74 = int_to_ptr.hbm [resolvable:$true] %s73
      %s75 = sshll.u32 [#allocation10], 4
      %s76 = int_to_ptr.vmem [resolvable:$true] %s75
      %78 = dma.hbm_to_vmem [thread:$0]  %s74, 128, %s76, [#allocation9]
    $region25: #{tpu_custom_call.1} parent=1 // pred_fallthru
      _
    // Predicated region
    $region26: #{tpu_custom_call.1} parent=1 // pred_check
      _
    $region27: #{tpu_custom_call.1} parent=1 // pred_check_branch
      %80 = sbr.rel (0) target = $region29
    $region28: #{tpu_custom_call.1} parent=1 // pred_region
      _
    $region29: #{tpu_custom_call.1} parent=1 // pred_fallthru
      _
    // Predicated region
    $region30: #{tpu_custom_call.1} parent=1 // pred_check
      _
    $region31: #{tpu_custom_call.1} parent=1 // pred_check_branch
      %82 = sbr.rel (0) target = $region33
    $region32: #{tpu_custom_call.1} parent=1 // pred_region
      _
    $region33: #{tpu_custom_call.1} parent=1 // pred_fallthru
      _
    // Predicated region
    $region34: #{tpu_custom_call.1} parent=1 // pred_check
      _
    $region35: #{tpu_custom_call.1} parent=1 // pred_check_branch
      %84 = sbr.rel (0) target = $region37
    $region36: #{tpu_custom_call.1} parent=1 // pred_region
      _
    $region37: #{tpu_custom_call.1} parent=1 // pred_fallthru
      _
    // Predicated region
    $region38: #{tpu_custom_call.1} parent=1 // pred_check
      _
    $region39: #{tpu_custom_call.1} parent=1 // pred_check_branch
      %86 = sbr.rel (0) target = $region41
    $region40: #{tpu_custom_call.1} parent=1 // pred_region
      %88 = dma.done [#allocation3], 128
    $region41: #{tpu_custom_call.1} parent=1 // pred_fallthru
      _
    // Predicated region
    $region42: #{tpu_custom_call.1} parent=1 // pred_check
      _
    $region43: #{tpu_custom_call.1} parent=1 // pred_check_branch
      %90 = sbr.rel (0) target = $region45
    $region44: #{tpu_custom_call.1} parent=1 // pred_region
      %92 = dma.done [#allocation6], 32
    $region45: #{tpu_custom_call.1} parent=1 // pred_fallthru
      _
    // Predicated region
    $region46: #{tpu_custom_call.1} parent=1 // pred_check
      _
    $region47: #{tpu_custom_call.1} parent=1 // pred_check_branch
      %94 = sbr.rel (0) target = $region49
    $region48: #{tpu_custom_call.1} parent=1 // pred_region
      %96 = dma.done [#allocation6], 512
    $region49: #{tpu_custom_call.1} parent=1 // pred_fallthru
      _
    // Predicated region
    $region50: #{tpu_custom_call.1} parent=1 // pred_check
      _
    $region51: #{tpu_custom_call.1} parent=1 // pred_check_branch
      %98 = sbr.rel (0) target = $region53
    $region52: #{tpu_custom_call.1} parent=1 // pred_region
      %100 = dma.done [#allocation9], 512
    $region53: #{tpu_custom_call.1} parent=1 // pred_fallthru
      _
    // Predicated region
    $region54: #{tpu_custom_call.1} parent=1 // pred_check
      _
    $region55: #{tpu_custom_call.1} parent=1 // pred_check_branch
      %102 = sbr.rel (0) target = $region57
    $region56: #{tpu_custom_call.1} parent=1 // pred_region
      %104 = dma.done [#allocation9], 128
    $region57: #{tpu_custom_call.1} parent=1 // pred_fallthru
      _
    %v106 = vld [vmem:[#allocation2] sm:$0xff]
    %v107 = vld [vmem:[%s2] sm:$0xf]
    %v108 = vld [vmem:[%s2 + $0x4] sm:$0xf]
    %v109 = vld [vmem:[%s2 + $0x8] sm:$0xf]
    %v110 = vld [vmem:[%s2 + $0xc] sm:$0xf]
    %v111 = vld [vmem:[%s2 + $0x10] sm:$0xf]
    %v112 = vld [vmem:[%s2 + $0x14] sm:$0xf]
    %v113 = vld [vmem:[%s2 + $0x18] sm:$0xf]
    %v114 = vld [vmem:[%s2 + $0x1c] sm:$0xf]
    %v115 = vld [vmem:[%s2 + $0x20] sm:$0xf]
    %v116 = vld [vmem:[%s2 + $0x24] sm:$0xf]
    %v117 = vld [vmem:[%s2 + $0x28] sm:$0xf]
    %v118 = vld [vmem:[%s2 + $0x2c] sm:$0xf]
    %v119 = vld [vmem:[%s2 + $0x30] sm:$0xf]
    %v120 = vld [vmem:[%s2 + $0x34] sm:$0xf]
    %v121 = vld [vmem:[%s2 + $0x38] sm:$0xf]
    %v122 = vld [vmem:[%s2 + $0x3c] sm:$0xf]
    %v123 = vld [vmem:[%s2 + $0x40] sm:$0xf]
    %v124 = vld [vmem:[%s2 + $0x44] sm:$0xf]
    %v125 = vld [vmem:[%s2 + $0x48] sm:$0xf]
    %v126 = vld [vmem:[%s2 + $0x4c] sm:$0xf]
    %v127 = vld [vmem:[%s2 + $0x50] sm:$0xf]
    %v128 = vld [vmem:[%s2 + $0x54] sm:$0xf]
    %v129 = vld [vmem:[%s2 + $0x58] sm:$0xf]
    %v130 = vld [vmem:[%s2 + $0x5c] sm:$0xf]
    %v131 = vld [vmem:[%s2 + $0x60] sm:$0xf]
    %v132 = vld [vmem:[%s2 + $0x64] sm:$0xf]
    %v133 = vld [vmem:[%s2 + $0x68] sm:$0xf]
    %v134 = vld [vmem:[%s2 + $0x6c] sm:$0xf]
    %v135 = vld [vmem:[%s2 + $0x70] sm:$0xf]
    %v136 = vld [vmem:[%s2 + $0x74] sm:$0xf]
    %v137 = vld [vmem:[%s2 + $0x78] sm:$0xf]
    %v138 = vld [vmem:[%s2 + $0x7c] sm:$0xf]
    %v139 = vld [vmem:[%s2 + $0x80] sm:$0xf]
    %v140 = vld [vmem:[%s2 + $0x84] sm:$0xf]
    %v141 = vld [vmem:[%s2 + $0x88] sm:$0xf]
    %v142 = vld [vmem:[%s2 + $0x8c] sm:$0xf]
    %v143 = vld [vmem:[%s2 + $0x90] sm:$0xf]
    %v144 = vld [vmem:[%s2 + $0x94] sm:$0xf]
    %v145 = vld [vmem:[%s2 + $0x98] sm:$0xf]
    %v146 = vld [vmem:[%s2 + $0x9c] sm:$0xf]
    %v147 = vld [vmem:[%s2 + $0xa0] sm:$0xf]
    %v148 = vld [vmem:[%s2 + $0xa4] sm:$0xf]
    %v149 = vld [vmem:[%s2 + $0xa8] sm:$0xf]
    %v150 = vld [vmem:[%s2 + $0xac] sm:$0xf]
    %v151 = vld [vmem:[%s2 + $0xb0] sm:$0xf]
    %v152 = vld [vmem:[%s2 + $0xb4] sm:$0xf]
    %v153 = vld [vmem:[%s2 + $0xb8] sm:$0xf]
    %v154 = vld [vmem:[%s2 + $0xbc] sm:$0xf]
    %v155 = vld [vmem:[%s2 + $0xc0] sm:$0xf]
    %v156 = vld [vmem:[%s2 + $0xc4] sm:$0xf]
    %v157 = vld [vmem:[%s2 + $0xc8] sm:$0xf]
    %v158 = vld [vmem:[%s2 + $0xcc] sm:$0xf]
    %v159 = vld [vmem:[%s2 + $0xd0] sm:$0xf]
    %v160 = vld [vmem:[%s2 + $0xd4] sm:$0xf]
    %v161 = vld [vmem:[%s2 + $0xd8] sm:$0xf]
    %v162 = vld [vmem:[%s2 + $0xdc] sm:$0xf]
    %v163 = vld [vmem:[%s2 + $0xe0] sm:$0xf]
    %v164 = vld [vmem:[%s2 + $0xe4] sm:$0xf]
    %v165 = vld [vmem:[%s2 + $0xe8] sm:$0xf]
    %v166 = vld [vmem:[%s2 + $0xec] sm:$0xf]
    %v167 = vld [vmem:[%s2 + $0xf0] sm:$0xf]
    %v168 = vld [vmem:[%s2 + $0xf4] sm:$0xf]
    %v169 = vld [vmem:[%s2 + $0xf8] sm:$0xf]
    %v170 = vld [vmem:[%s2 + $0xfc] sm:$0xf]
    %v171 = vld [vmem:[%s2 + $0x100] sm:$0xf]
    %v172 = vld [vmem:[%s2 + $0x104] sm:$0xf]
    %v173 = vld [vmem:[%s2 + $0x108] sm:$0xf]
    %v174 = vld [vmem:[%s2 + $0x10c] sm:$0xf]
    %v175 = vld [vmem:[%s2 + $0x110] sm:$0xf]
    %v176 = vld [vmem:[%s2 + $0x114] sm:$0xf]
    %v177 = vld [vmem:[%s2 + $0x118] sm:$0xf]
    %v178 = vld [vmem:[%s2 + $0x11c] sm:$0xf]
    %v179 = vld [vmem:[%s2 + $0x120] sm:$0xf]
    %v180 = vld [vmem:[%s2 + $0x124] sm:$0xf]
    %v181 = vld [vmem:[%s2 + $0x128] sm:$0xf]
    %v182 = vld [vmem:[%s2 + $0x12c] sm:$0xf]
    %v183 = vld [vmem:[%s2 + $0x130] sm:$0xf]
    %v184 = vld [vmem:[%s2 + $0x134] sm:$0xf]
    %v185 = vld [vmem:[%s2 + $0x138] sm:$0xf]
    %v186 = vld [vmem:[%s2 + $0x13c] sm:$0xf]
    %v187 = vld [vmem:[%s2 + $0x140] sm:$0xf]
    %v188 = vld [vmem:[%s2 + $0x144] sm:$0xf]
    %v189 = vld [vmem:[%s2 + $0x148] sm:$0xf]
    %v190 = vld [vmem:[%s2 + $0x14c] sm:$0xf]
    %v191 = vld [vmem:[%s2 + $0x150] sm:$0xf]
    %v192 = vld [vmem:[%s2 + $0x154] sm:$0xf]
    %v193 = vld [vmem:[%s2 + $0x158] sm:$0xf]
    %v194 = vld [vmem:[%s2 + $0x15c] sm:$0xf]
    %v195 = vld [vmem:[%s2 + $0x160] sm:$0xf]
    %v196 = vld [vmem:[%s2 + $0x164] sm:$0xf]
    %v197 = vld [vmem:[%s2 + $0x168] sm:$0xf]
    %v198 = vld [vmem:[%s2 + $0x16c] sm:$0xf]
    %v199 = vld [vmem:[%s2 + $0x170] sm:$0xf]
    %v200 = vld [vmem:[%s2 + $0x174] sm:$0xf]
    %v201 = vld [vmem:[%s2 + $0x178] sm:$0xf]
    %v202 = vld [vmem:[%s2 + $0x17c] sm:$0xf]
    %v203 = vld [vmem:[%s2 + $0x180] sm:$0xf]
    %v204 = vld [vmem:[%s2 + $0x184] sm:$0xf]
    %v205 = vld [vmem:[%s2 + $0x188] sm:$0xf]
    %v206 = vld [vmem:[%s2 + $0x18c] sm:$0xf]
    %v207 = vld [vmem:[%s2 + $0x190] sm:$0xf]
    %v208 = vld [vmem:[%s2 + $0x194] sm:$0xf]
    %v209 = vld [vmem:[%s2 + $0x198] sm:$0xf]
    %v210 = vld [vmem:[%s2 + $0x19c] sm:$0xf]
    %v211 = vld [vmem:[%s2 + $0x1a0] sm:$0xf]
    %v212 = vld [vmem:[%s2 + $0x1a4] sm:$0xf]
    %v213 = vld [vmem:[%s2 + $0x1a8] sm:$0xf]
    %v214 = vld [vmem:[%s2 + $0x1ac] sm:$0xf]
    %v215 = vld [vmem:[%s2 + $0x1b0] sm:$0xf]
    %v216 = vld [vmem:[%s2 + $0x1b4] sm:$0xf]
    %v217 = vld [vmem:[%s2 + $0x1b8] sm:$0xf]
    %v218 = vld [vmem:[%s2 + $0x1bc] sm:$0xf]
    %v219 = vld [vmem:[%s2 + $0x1c0] sm:$0xf]
    %v220 = vld [vmem:[%s2 + $0x1c4] sm:$0xf]
    %v221 = vld [vmem:[%s2 + $0x1c8] sm:$0xf]
    %v222 = vld [vmem:[%s2 + $0x1cc] sm:$0xf]
    %v223 = vld [vmem:[%s2 + $0x1d0] sm:$0xf]
    %v224 = vld [vmem:[%s2 + $0x1d4] sm:$0xf]
    %v225 = vld [vmem:[%s2 + $0x1d8] sm:$0xf]
    %v226 = vld [vmem:[%s2 + $0x1dc] sm:$0xf]
    %v227 = vld [vmem:[%s2 + $0x1e0] sm:$0xf]
    %v228 = vld [vmem:[%s2 + $0x1e4] sm:$0xf]
    %v229 = vld [vmem:[%s2 + $0x1e8] sm:$0xf]
    %v230 = vld [vmem:[%s2 + $0x1ec] sm:$0xf]
    %v231 = vld [vmem:[%s2 + $0x1f0] sm:$0xf]
    %v232 = vld [vmem:[%s2 + $0x1f4] sm:$0xf]
    %v233 = vld [vmem:[%s2 + $0x1f8] sm:$0xf]
    %v234 = vld [vmem:[%s2 + $0x1fc] sm:$0xf]
    %236 = vst [vmem:[#allocation1] ss:$9 sm:$0xff] %v106
    %v237 = vld [vmem:[#allocation1] sm:$0xff]
    %v238 = vld [vmem:[#allocation1 + $0x9] sm:$0xff]
    %v239 = vld [vmem:[#allocation1 + $0x12] sm:$0xff]
    %v240 = vld [vmem:[#allocation1 + $0x1b] sm:$0xff]
    %v241 = vld [vmem:[#allocation1 + $0x24] sm:$0xff]
    %v242 = vld [vmem:[#allocation1 + $0x2d] sm:$0xff]
    %v243 = vld [vmem:[#allocation1 + $0x36] sm:$0xff]
    %v244 = vld [vmem:[#allocation1 + $0x3f] sm:$0xff]
    %v381 = vunpack.c.l.b16 %v107
    %v382 = vunpack.c.l.b16 %v108
    %v383 = vunpack.c.l.b16 %v109
    %v384 = vunpack.c.l.b16 %v110
    %v385 = vunpack.c.l.b16 %v111
    %v386 = vunpack.c.l.b16 %v112
    %v387 = vunpack.c.l.b16 %v113
    %v388 = vunpack.c.l.b16 %v114
    %v389 = vunpack.c.l.b16 %v115
    %v390 = vunpack.c.l.b16 %v116
    %v391 = vunpack.c.l.b16 %v117
    %v392 = vunpack.c.l.b16 %v118
    %v393 = vunpack.c.l.b16 %v119
    %v394 = vunpack.c.l.b16 %v120
    %v395 = vunpack.c.l.b16 %v121
    %v396 = vunpack.c.l.b16 %v122
    %v397 = vunpack.c.l.b16 %v123
    %v398 = vunpack.c.l.b16 %v124
    %v399 = vunpack.c.l.b16 %v125
    %v400 = vunpack.c.l.b16 %v126
    %v401 = vunpack.c.l.b16 %v127
    %v402 = vunpack.c.l.b16 %v128
    %v403 = vunpack.c.l.b16 %v129
    %v404 = vunpack.c.l.b16 %v130
    %v405 = vunpack.c.l.b16 %v131
    %v406 = vunpack.c.l.b16 %v132
    %v407 = vunpack.c.l.b16 %v133
    %v408 = vunpack.c.l.b16 %v134
    %v409 = vunpack.c.l.b16 %v135
    %v410 = vunpack.c.l.b16 %v136
    %v411 = vunpack.c.l.b16 %v137
    %v412 = vunpack.c.l.b16 %v138
    %v413 = vunpack.c.l.b16 %v139
    %v414 = vunpack.c.l.b16 %v140
    %v415 = vunpack.c.l.b16 %v141
    %v416 = vunpack.c.l.b16 %v142
    %v417 = vunpack.c.l.b16 %v143
    %v418 = vunpack.c.l.b16 %v144
    %v419 = vunpack.c.l.b16 %v145
    %v420 = vunpack.c.l.b16 %v146
    %v421 = vunpack.c.l.b16 %v147
    %v422 = vunpack.c.l.b16 %v148
    %v423 = vunpack.c.l.b16 %v149
    %v424 = vunpack.c.l.b16 %v150
    %v425 = vunpack.c.l.b16 %v151
    %v426 = vunpack.c.l.b16 %v152
    %v427 = vunpack.c.l.b16 %v153
    %v428 = vunpack.c.l.b16 %v154
    %v429 = vunpack.c.l.b16 %v155
    %v430 = vunpack.c.l.b16 %v156
    %v431 = vunpack.c.l.b16 %v157
    %v432 = vunpack.c.l.b16 %v158
    %v433 = vunpack.c.l.b16 %v159
    %v434 = vunpack.c.l.b16 %v160
    %v435 = vunpack.c.l.b16 %v161
    %v436 = vunpack.c.l.b16 %v162
    %v437 = vunpack.c.l.b16 %v163
    %v438 = vunpack.c.l.b16 %v164
    %v439 = vunpack.c.l.b16 %v165
    %v440 = vunpack.c.l.b16 %v166
    %v441 = vunpack.c.l.b16 %v167
    %v442 = vunpack.c.l.b16 %v168
    %v443 = vunpack.c.l.b16 %v169
    %v444 = vunpack.c.l.b16 %v170
    %v445 = vunpack.c.l.b16 %v171
    %v446 = vunpack.c.l.b16 %v172
    %v447 = vunpack.c.l.b16 %v173
    %v448 = vunpack.c.l.b16 %v174
    %v449 = vunpack.c.l.b16 %v175
    %v450 = vunpack.c.l.b16 %v176
    %v451 = vunpack.c.l.b16 %v177
    %v452 = vunpack.c.l.b16 %v178
    %v453 = vunpack.c.l.b16 %v179
    %v454 = vunpack.c.l.b16 %v180
    %v455 = vunpack.c.l.b16 %v181
    %v456 = vunpack.c.l.b16 %v182
    %v457 = vunpack.c.l.b16 %v183
    %v458 = vunpack.c.l.b16 %v184
    %v459 = vunpack.c.l.b16 %v185
    %v460 = vunpack.c.l.b16 %v186
    %v461 = vunpack.c.l.b16 %v187
    %v462 = vunpack.c.l.b16 %v188
    %v463 = vunpack.c.l.b16 %v189
    %v464 = vunpack.c.l.b16 %v190
    %v465 = vunpack.c.l.b16 %v191
    %v466 = vunpack.c.l.b16 %v192
    %v467 = vunpack.c.l.b16 %v193
    %v468 = vunpack.c.l.b16 %v194
    %v469 = vunpack.c.l.b16 %v195
    %v470 = vunpack.c.l.b16 %v196
    %v471 = vunpack.c.l.b16 %v197
    %v472 = vunpack.c.l.b16 %v198
    %v473 = vunpack.c.l.b16 %v199
    %v474 = vunpack.c.l.b16 %v200
    %v475 = vunpack.c.l.b16 %v201
    %v476 = vunpack.c.l.b16 %v202
    %v477 = vunpack.c.l.b16 %v203
    %v478 = vunpack.c.l.b16 %v204
    %v479 = vunpack.c.l.b16 %v205
    %v480 = vunpack.c.l.b16 %v206
    %v481 = vunpack.c.l.b16 %v207
    %v482 = vunpack.c.l.b16 %v208
    %v483 = vunpack.c.l.b16 %v209
    %v484 = vunpack.c.l.b16 %v210
    %v485 = vunpack.c.l.b16 %v211
    %v486 = vunpack.c.l.b16 %v212
    %v487 = vunpack.c.l.b16 %v213
    %v488 = vunpack.c.l.b16 %v214
    %v489 = vunpack.c.l.b16 %v215
    %v490 = vunpack.c.l.b16 %v216
    %v491 = vunpack.c.l.b16 %v217
    %v492 = vunpack.c.l.b16 %v218
    %v493 = vunpack.c.l.b16 %v219
    %v494 = vunpack.c.l.b16 %v220
    %v495 = vunpack.c.l.b16 %v221
    %v496 = vunpack.c.l.b16 %v222
    %v497 = vunpack.c.l.b16 %v223
    %v498 = vunpack.c.l.b16 %v224
    %v499 = vunpack.c.l.b16 %v225
    %v500 = vunpack.c.l.b16 %v226
    %v501 = vunpack.c.l.b16 %v227
    %v502 = vunpack.c.l.b16 %v228
    %v503 = vunpack.c.l.b16 %v229
    %v504 = vunpack.c.l.b16 %v230
    %v505 = vunpack.c.l.b16 %v231
    %v506 = vunpack.c.l.b16 %v232
    %v507 = vunpack.c.l.b16 %v233
    %v508 = vunpack.c.l.b16 %v234
    %v509 = vpack.c.b16 %v382, %v381
    %v510 = vpack.c.b16 %v384, %v383
    %v511 = vpack.c.b16 %v386, %v385
    %v512 = vpack.c.b16 %v388, %v387
    %v513 = vpack.c.b16 %v390, %v389
    %v514 = vpack.c.b16 %v392, %v391
    %v515 = vpack.c.b16 %v394, %v393
    %v516 = vpack.c.b16 %v396, %v395
    %v517 = vpack.c.b16 %v398, %v397
    %v518 = vpack.c.b16 %v400, %v399
    %v519 = vpack.c.b16 %v402, %v401
    %v520 = vpack.c.b16 %v404, %v403
    %v521 = vpack.c.b16 %v406, %v405
    %v522 = vpack.c.b16 %v408, %v407
    %v523 = vpack.c.b16 %v410, %v409
    %v524 = vpack.c.b16 %v412, %v411
    %v525 = vpack.c.b16 %v414, %v413
    %v526 = vpack.c.b16 %v416, %v415
    %v527 = vpack.c.b16 %v418, %v417
    %v528 = vpack.c.b16 %v420, %v419
    %v529 = vpack.c.b16 %v422, %v421
    %v530 = vpack.c.b16 %v424, %v423
    %v531 = vpack.c.b16 %v426, %v425
    %v532 = vpack.c.b16 %v428, %v427
    %v533 = vpack.c.b16 %v430, %v429
    %v534 = vpack.c.b16 %v432, %v431
    %v535 = vpack.c.b16 %v434, %v433
    %v536 = vpack.c.b16 %v436, %v435
    %v537 = vpack.c.b16 %v438, %v437
    %v538 = vpack.c.b16 %v440, %v439
    %v539 = vpack.c.b16 %v442, %v441
    %v540 = vpack.c.b16 %v444, %v443
    %v541 = vpack.c.b16 %v446, %v445
    %v542 = vpack.c.b16 %v448, %v447
    %v543 = vpack.c.b16 %v450, %v449
    %v544 = vpack.c.b16 %v452, %v451
    %v545 = vpack.c.b16 %v454, %v453
    %v546 = vpack.c.b16 %v456, %v455
    %v547 = vpack.c.b16 %v458, %v457
    %v548 = vpack.c.b16 %v460, %v459
    %v549 = vpack.c.b16 %v462, %v461
    %v550 = vpack.c.b16 %v464, %v463
    %v551 = vpack.c.b16 %v466, %v465
    %v552 = vpack.c.b16 %v468, %v467
    %v553 = vpack.c.b16 %v470, %v469
    %v554 = vpack.c.b16 %v472, %v471
    %v555 = vpack.c.b16 %v474, %v473
    %v556 = vpack.c.b16 %v476, %v475
    %v557 = vpack.c.b16 %v478, %v477
    %v558 = vpack.c.b16 %v480, %v479
    %v559 = vpack.c.b16 %v482, %v481
    %v560 = vpack.c.b16 %v484, %v483
    %v561 = vpack.c.b16 %v486, %v485
    %v562 = vpack.c.b16 %v488, %v487
    %v563 = vpack.c.b16 %v490, %v489
    %v564 = vpack.c.b16 %v492, %v491
    %v565 = vpack.c.b16 %v494, %v493
    %v566 = vpack.c.b16 %v496, %v495
    %v567 = vpack.c.b16 %v498, %v497
    %v568 = vpack.c.b16 %v500, %v499
    %v569 = vpack.c.b16 %v502, %v501
    %v570 = vpack.c.b16 %v504, %v503
    %v571 = vpack.c.b16 %v506, %v505
    %v572 = vpack.c.b16 %v508, %v507
    %637 = vmatpush.bf16.msra.mxu0 %v516
    %638 = vmatpush.bf16.msra.mxu0 %v515
    %639 = vmatpush.bf16.msra.mxu0 %v514
    %640 = vmatpush.bf16.msra.mxu0 %v513
    %641 = vmatpush.bf16.msra.mxu0 %v512
    %642 = vmatpush.bf16.msra.mxu0 %v511
    %643 = vmatpush.bf16.msra.mxu0 %v510
    %644 = vmatpush.bf16.msra.mxu0 %v509
    %645 = vmatmul.bf16.gmra.mxu0 %v237
    %v646 = vpop.f32.mrf.mxu0
    %v647 = vadd.f32 0.0, %v646
    %v648 = vpop.f32.mrf.mxu0
    %649 = vdwg.mxu0
    %650 = vmatpush.bf16.msra.mxu0 %v524
    %651 = vmatpush.bf16.msra.mxu0 %v523
    %652 = vmatpush.bf16.msra.mxu0 %v522
    %653 = vmatpush.bf16.msra.mxu0 %v521
    %654 = vmatpush.bf16.msra.mxu0 %v520
    %655 = vmatpush.bf16.msra.mxu0 %v519
    %656 = vmatpush.bf16.msra.mxu0 %v518
    %657 = vmatpush.bf16.msra.mxu0 %v517
    %658 = vmatmul.bf16.gmra.mxu0 %v238
    %v659 = vpop.f32.mrf.mxu0
    %v660 = vadd.f32 %v647, %v659
    %v661 = vpop.f32.mrf.mxu0
    %662 = vdwg.mxu0
    %663 = vmatpush.bf16.msra.mxu0 %v532
    %664 = vmatpush.bf16.msra.mxu0 %v531
    %665 = vmatpush.bf16.msra.mxu0 %v530
    %666 = vmatpush.bf16.msra.mxu0 %v529
    %667 = vmatpush.bf16.msra.mxu0 %v528
    %668 = vmatpush.bf16.msra.mxu0 %v527
    %669 = vmatpush.bf16.msra.mxu0 %v526
    %670 = vmatpush.bf16.msra.mxu0 %v525
    %671 = vmatmul.bf16.gmra.mxu0 %v239
    %v672 = vpop.f32.mrf.mxu0
    %v673 = vadd.f32 %v660, %v672
    %v674 = vpop.f32.mrf.mxu0
    %675 = vdwg.mxu0
    %676 = vmatpush.bf16.msra.mxu0 %v540
    %677 = vmatpush.bf16.msra.mxu0 %v539
    %678 = vmatpush.bf16.msra.mxu0 %v538
    %679 = vmatpush.bf16.msra.mxu0 %v537
    %680 = vmatpush.bf16.msra.mxu0 %v536
    %681 = vmatpush.bf16.msra.mxu0 %v535
    %682 = vmatpush.bf16.msra.mxu0 %v534
    %683 = vmatpush.bf16.msra.mxu0 %v533
    %684 = vmatmul.bf16.gmra.mxu0 %v240
    %v685 = vpop.f32.mrf.mxu0
    %v686 = vadd.f32 %v673, %v685
    %v687 = vpop.f32.mrf.mxu0
    %688 = vdwg.mxu0
    %689 = vmatpush.bf16.msra.mxu0 %v548
    %690 = vmatpush.bf16.msra.mxu0 %v547
    %691 = vmatpush.bf16.msra.mxu0 %v546
    %692 = vmatpush.bf16.msra.mxu0 %v545
    %693 = vmatpush.bf16.msra.mxu0 %v544
    %694 = vmatpush.bf16.msra.mxu0 %v543
    %695 = vmatpush.bf16.msra.mxu0 %v542
    %696 = vmatpush.bf16.msra.mxu0 %v541
    %697 = vmatmul.bf16.gmra.mxu0 %v241
    %v698 = vpop.f32.mrf.mxu0
    %v699 = vadd.f32 %v686, %v698
    %v700 = vpop.f32.mrf.mxu0
    %701 = vdwg.mxu0
    %702 = vmatpush.bf16.msra.mxu0 %v556
    %703 = vmatpush.bf16.msra.mxu0 %v555
    %704 = vmatpush.bf16.msra.mxu0 %v554
    %705 = vmatpush.bf16.msra.mxu0 %v553
    %706 = vmatpush.bf16.msra.mxu0 %v552
    %707 = vmatpush.bf16.msra.mxu0 %v551
    %708 = vmatpush.bf16.msra.mxu0 %v550
    %709 = vmatpush.bf16.msra.mxu0 %v549
    %710 = vmatmul.bf16.gmra.mxu0 %v242
    %v711 = vpop.f32.mrf.mxu0
    %v712 = vadd.f32 %v699, %v711
    %v713 = vpop.f32.mrf.mxu0
    %714 = vdwg.mxu0
    %715 = vmatpush.bf16.msra.mxu0 %v564
    %716 = vmatpush.bf16.msra.mxu0 %v563
    %717 = vmatpush.bf16.msra.mxu0 %v562
    %718 = vmatpush.bf16.msra.mxu0 %v561
    %719 = vmatpush.bf16.msra.mxu0 %v560
    %720 = vmatpush.bf16.msra.mxu0 %v559
    %721 = vmatpush.bf16.msra.mxu0 %v558
    %722 = vmatpush.bf16.msra.mxu0 %v557
    %723 = vmatmul.bf16.gmra.mxu0 %v243
    %v724 = vpop.f32.mrf.mxu0
    %v725 = vadd.f32 %v712, %v724
    %v726 = vpop.f32.mrf.mxu0
    %727 = vdwg.mxu0
    %728 = vmatpush.bf16.msra.mxu0 %v572
    %729 = vmatpush.bf16.msra.mxu0 %v571
    %730 = vmatpush.bf16.msra.mxu0 %v570
    %731 = vmatpush.bf16.msra.mxu0 %v569
    %732 = vmatpush.bf16.msra.mxu0 %v568
    %733 = vmatpush.bf16.msra.mxu0 %v567
    %734 = vmatpush.bf16.msra.mxu0 %v566
    %735 = vmatpush.bf16.msra.mxu0 %v565
    %736 = vmatmul.bf16.gmra.mxu0 %v244
    %v737 = vpop.f32.mrf.mxu0
    %v738 = vadd.f32 %v725, %v737
    %v739 = vpop.f32.mrf.mxu0
    %740 = vdwg.mxu0
    %v741 = vpack.c.bf16 %v738, %v738
    %v742 = vld [vmem:[#allocation7] sm:$0xff]
    %v743 = vld [vmem:[#allocation7 + $0x8] sm:$0xff]
    %v744 = vld [vmem:[#allocation7 + $0x10] sm:$0xff]
    %v745 = vld [vmem:[#allocation7 + $0x18] sm:$0xff]
    %v746 = vld [vmem:[#allocation5] sm:$0x3]
    %v747 = vld [vmem:[#allocation8] sm:$0xff]
    %v748 = vld [vmem:[#allocation8 + $0x8] sm:$0xff]
    %v749 = vld [vmem:[#allocation8 + $0x10] sm:$0x1]
    %v750 = vld [vmem:[#allocation8 + $0x18] sm:$0x1]
    %vm751 = vcmask 72704
    %v753 = vsel %vm751, %v746, 0
    %vm755 = vcmask 1040384
    %v757 = vsel %vm755, %v749, 0
    %v760 = vsel %vm755, %v750, 0
    %762 = vmatpush.msra.mxu0 0.0
    %763 = vmatpush.msra.mxu0 0.0
    %764 = vmatpush.msra.mxu0 0.0
    %765 = vmatpush.msra.mxu0 0.0
    %766 = vmatpush.msra.mxu0 0.0
    %767 = vmatpush.msra.mxu0 0.0
    %768 = vmatpush.msra.mxu0 0.0
    %769 = vmatpush.msra.mxu0 0.0
    %770 = vmatpush.msra.mxu0 0.0
    %771 = vmatpush.msra.mxu0 0.0
    %772 = vmatpush.msra.mxu0 0.0
    %773 = vmatpush.msra.mxu0 0.0
    %774 = vmatpush.msra.mxu0 0.0
    %775 = vmatpush.msra.mxu0 0.0
    %776 = vmatpush.msra.mxu0 %v757
    %777 = vmatpush.msra.mxu0 %v747
    %778 = vmatmul.f32.gmra.mxu0 %v753
    %v779 = vpop.f32.mrf.mxu0
    %v780 = vadd.f32 0.0, %v779
    %781 = vdwg.mxu0
    %782 = vmatpush.msra.mxu0 0.0
    %783 = vmatpush.msra.mxu0 0.0
    %784 = vmatpush.msra.mxu0 0.0
    %785 = vmatpush.msra.mxu0 0.0
    %786 = vmatpush.msra.mxu0 0.0
    %787 = vmatpush.msra.mxu0 0.0
    %788 = vmatpush.msra.mxu0 0.0
    %789 = vmatpush.msra.mxu0 0.0
    %790 = vmatpush.msra.mxu0 0.0
    %791 = vmatpush.msra.mxu0 0.0
    %792 = vmatpush.msra.mxu0 0.0
    %793 = vmatpush.msra.mxu0 0.0
    %794 = vmatpush.msra.mxu0 0.0
    %795 = vmatpush.msra.mxu0 0.0
    %796 = vmatpush.msra.mxu0 %v760
    %797 = vmatpush.msra.mxu0 %v748
    %798 = vmatmul.f32.gmra.mxu0 %v753
    %v799 = vpop.f32.mrf.mxu0
    %v800 = vadd.f32 0.0, %v799
    %801 = vdwg.mxu0
    %v806 = vunpack.c.l.b16 %v742
    %v807 = vunpack.c.h.b16 %v742
    %v808 = vunpack.c.l.b16 %v743
    %v809 = vunpack.c.h.b16 %v743
    %v810 = vunpack.c.l.b16 %v744
    %v811 = vunpack.c.h.b16 %v744
    %v812 = vunpack.c.l.b16 %v745
    %v813 = vunpack.c.h.b16 %v745
    %v814 = vpack.c.b16 %v808, %v806
    %v815 = vpack.c.b16 %v809, %v807
    %v816 = vpack.c.b16 %v812, %v810
    %v817 = vpack.c.b16 %v813, %v811
    %vm822 = vcmask 261120
    %v824 = vsel %vm822, %v741, 0
    %826 = vmatpush.bf16.msra.mxu0 0
    %827 = vmatpush.bf16.msra.mxu0 0
    %828 = vmatpush.bf16.msra.mxu0 0
    %829 = vmatpush.bf16.msra.mxu0 0
    %830 = vmatpush.bf16.msra.mxu0 0
    %831 = vmatpush.bf16.msra.mxu0 0
    %832 = vmatpush.bf16.msra.mxu0 %v816
    %833 = vmatpush.bf16.msra.mxu0 %v814
    %834 = vmatmul.bf16.gmra.mxu0 %v824
    %v835 = vpop.f32.mrf.mxu0
    %v836 = vadd.f32 %v780, %v835
    %v837 = vpop.f32.mrf.mxu0
    %838 = vdwg.mxu0
    %839 = vmatpush.bf16.msra.mxu0 0
    %840 = vmatpush.bf16.msra.mxu0 0
    %841 = vmatpush.bf16.msra.mxu0 0
    %842 = vmatpush.bf16.msra.mxu0 0
    %843 = vmatpush.bf16.msra.mxu0 0
    %844 = vmatpush.bf16.msra.mxu0 0
    %845 = vmatpush.bf16.msra.mxu0 %v817
    %846 = vmatpush.bf16.msra.mxu0 %v815
    %847 = vmatmul.bf16.gmra.mxu0 %v824
    %v848 = vpop.f32.mrf.mxu0
    %v849 = vadd.f32 %v800, %v848
    %v850 = vpop.f32.mrf.mxu0
    %851 = vdwg.mxu0
    %v852 = vld [vmem:[#allocation10] ss:$4 sm:$0x3]
    %v854 = vperm.slane %v852, 0
    %v855 = vperm.slane %v852, 1
    %v858 = vadd.f32 %v836, %v854
    %v859 = vadd.f32 %v849, %v855
    %v860 = vmul.f32 %v858, 0.01
    %v861 = vmul.f32 %v859, 0.01
    %v862 = vmax.f32 %v858, %v860
    %v863 = vmax.f32 %v859, %v861
    %v864 = vpack.c.bf16 %v862, %v862
    %v865 = vpack.c.bf16 %v863, %v863
    %v866 = vld [vmem:[%s6] sm:$0xff]
    %v867 = vld [vmem:[%s6 + $0x8] sm:$0xff]
    %v868 = vld [vmem:[%s6 + $0x10] sm:$0xff]
    %v869 = vld [vmem:[%s6 + $0x18] sm:$0xff]
    %v870 = vld [vmem:[%s6 + $0x20] sm:$0xff]
    %v871 = vld [vmem:[%s6 + $0x28] sm:$0xff]
    %v872 = vld [vmem:[%s6 + $0x30] sm:$0xff]
    %v873 = vld [vmem:[%s6 + $0x38] sm:$0xff]
    %v874 = vld [vmem:[%s6 + $0x40] sm:$0xff]
    %v875 = vld [vmem:[%s6 + $0x48] sm:$0xff]
    %v876 = vld [vmem:[%s6 + $0x50] sm:$0xff]
    %v877 = vld [vmem:[%s6 + $0x58] sm:$0xff]
    %v878 = vld [vmem:[%s6 + $0x60] sm:$0xff]
    %v879 = vld [vmem:[%s6 + $0x68] sm:$0xff]
    %v880 = vld [vmem:[%s6 + $0x70] sm:$0xff]
    %v881 = vld [vmem:[%s6 + $0x78] sm:$0xff]
    %v882 = vld [vmem:[%s6 + $0x80] sm:$0xff]
    %v883 = vld [vmem:[%s6 + $0x88] sm:$0xff]
    %v884 = vld [vmem:[%s6 + $0x90] sm:$0xff]
    %v885 = vld [vmem:[%s6 + $0x98] sm:$0xff]
    %v886 = vld [vmem:[%s6 + $0xa0] sm:$0xff]
    %v887 = vld [vmem:[%s6 + $0xa8] sm:$0xff]
    %v888 = vld [vmem:[%s6 + $0xb0] sm:$0xff]
    %v889 = vld [vmem:[%s6 + $0xb8] sm:$0xff]
    %v890 = vld [vmem:[%s6 + $0xc0] sm:$0xff]
    %v891 = vld [vmem:[%s6 + $0xc8] sm:$0xff]
    %v892 = vld [vmem:[%s6 + $0xd0] sm:$0xff]
    %v893 = vld [vmem:[%s6 + $0xd8] sm:$0xff]
    %v894 = vld [vmem:[%s6 + $0xe0] sm:$0xff]
    %v895 = vld [vmem:[%s6 + $0xe8] sm:$0xff]
    %v896 = vld [vmem:[%s6 + $0xf0] sm:$0xff]
    %v897 = vld [vmem:[%s6 + $0xf8] sm:$0xff]
    %s898 = scalar_lea.vmem [#allocation10], 1
    %v899 = vld [vmem:[%s898] ss:$4 sm:$0x3]
    %v901 = vperm.slane %v899, 0
    %v902 = vperm.slane %v899, 1
    %v937 = vunpack.c.l.b16 %v866
    %v938 = vunpack.c.h.b16 %v866
    %v939 = vunpack.c.l.b16 %v867
    %v940 = vunpack.c.h.b16 %v867
    %v941 = vunpack.c.l.b16 %v868
    %v942 = vunpack.c.h.b16 %v868
    %v943 = vunpack.c.l.b16 %v869
    %v944 = vunpack.c.h.b16 %v869
    %v945 = vunpack.c.l.b16 %v870
    %v946 = vunpack.c.h.b16 %v870
    %v947 = vunpack.c.l.b16 %v871
    %v948 = vunpack.c.h.b16 %v871
    %v949 = vunpack.c.l.b16 %v872
    %v950 = vunpack.c.h.b16 %v872
    %v951 = vunpack.c.l.b16 %v873
    %v952 = vunpack.c.h.b16 %v873
    %v953 = vunpack.c.l.b16 %v874
    %v954 = vunpack.c.h.b16 %v874
    %v955 = vunpack.c.l.b16 %v875
    %v956 = vunpack.c.h.b16 %v875
    %v957 = vunpack.c.l.b16 %v876
    %v958 = vunpack.c.h.b16 %v876
    %v959 = vunpack.c.l.b16 %v877
    %v960 = vunpack.c.h.b16 %v877
    %v961 = vunpack.c.l.b16 %v878
    %v962 = vunpack.c.h.b16 %v878
    %v963 = vunpack.c.l.b16 %v879
    %v964 = vunpack.c.h.b16 %v879
    %v965 = vunpack.c.l.b16 %v880
    %v966 = vunpack.c.h.b16 %v880
    %v967 = vunpack.c.l.b16 %v881
    %v968 = vunpack.c.h.b16 %v881
    %v969 = vunpack.c.l.b16 %v882
    %v970 = vunpack.c.h.b16 %v882
    %v971 = vunpack.c.l.b16 %v883
    %v972 = vunpack.c.h.b16 %v883
    %v973 = vunpack.c.l.b16 %v884
    %v974 = vunpack.c.h.b16 %v884
    %v975 = vunpack.c.l.b16 %v885
    %v976 = vunpack.c.h.b16 %v885
    %v977 = vunpack.c.l.b16 %v886
    %v978 = vunpack.c.h.b16 %v886
    %v979 = vunpack.c.l.b16 %v887
    %v980 = vunpack.c.h.b16 %v887
    %v981 = vunpack.c.l.b16 %v888
    %v982 = vunpack.c.h.b16 %v888
    %v983 = vunpack.c.l.b16 %v889
    %v984 = vunpack.c.h.b16 %v889
    %v985 = vunpack.c.l.b16 %v890
    %v986 = vunpack.c.h.b16 %v890
    %v987 = vunpack.c.l.b16 %v891
    %v988 = vunpack.c.h.b16 %v891
    %v989 = vunpack.c.l.b16 %v892
    %v990 = vunpack.c.h.b16 %v892
    %v991 = vunpack.c.l.b16 %v893
    %v992 = vunpack.c.h.b16 %v893
    %v993 = vunpack.c.l.b16 %v894
    %v994 = vunpack.c.h.b16 %v894
    %v995 = vunpack.c.l.b16 %v895
    %v996 = vunpack.c.h.b16 %v895
    %v997 = vunpack.c.l.b16 %v896
    %v998 = vunpack.c.h.b16 %v896
    %v999 = vunpack.c.l.b16 %v897
    %v1000 = vunpack.c.h.b16 %v897
    %v1001 = vpack.c.b16 %v939, %v937
    %v1002 = vpack.c.b16 %v940, %v938
    %v1003 = vpack.c.b16 %v943, %v941
    %v1004 = vpack.c.b16 %v944, %v942
    %v1005 = vpack.c.b16 %v947, %v945
    %v1006 = vpack.c.b16 %v948, %v946
    %v1007 = vpack.c.b16 %v951, %v949
    %v1008 = vpack.c.b16 %v952, %v950
    %v1009 = vpack.c.b16 %v955, %v953
    %v1010 = vpack.c.b16 %v956, %v954
    %v1011 = vpack.c.b16 %v959, %v957
    %v1012 = vpack.c.b16 %v960, %v958
    %v1013 = vpack.c.b16 %v963, %v961
    %v1014 = vpack.c.b16 %v964, %v962
    %v1015 = vpack.c.b16 %v967, %v965
    %v1016 = vpack.c.b16 %v968, %v966
    %v1017 = vpack.c.b16 %v971, %v969
    %v1018 = vpack.c.b16 %v972, %v970
    %v1019 = vpack.c.b16 %v975, %v973
    %v1020 = vpack.c.b16 %v976, %v974
    %v1021 = vpack.c.b16 %v979, %v977
    %v1022 = vpack.c.b16 %v980, %v978
    %v1023 = vpack.c.b16 %v983, %v981
    %v1024 = vpack.c.b16 %v984, %v982
    %v1025 = vpack.c.b16 %v987, %v985
    %v1026 = vpack.c.b16 %v988, %v986
    %v1027 = vpack.c.b16 %v991, %v989
    %v1028 = vpack.c.b16 %v992, %v990
    %v1029 = vpack.c.b16 %v995, %v993
    %v1030 = vpack.c.b16 %v996, %v994
    %v1031 = vpack.c.b16 %v999, %v997
    %v1032 = vpack.c.b16 %v1000, %v998
    %1065 = vmatpush.bf16.msra.mxu0 %v1015
    %1066 = vmatpush.bf16.msra.mxu0 %v1013
    %1067 = vmatpush.bf16.msra.mxu0 %v1011
    %1068 = vmatpush.bf16.msra.mxu0 %v1009
    %1069 = vmatpush.bf16.msra.mxu0 %v1007
    %1070 = vmatpush.bf16.msra.mxu0 %v1005
    %1071 = vmatpush.bf16.msra.mxu0 %v1003
    %1072 = vmatpush.bf16.msra.mxu0 %v1001
    %1073 = vmatmul.bf16.gmra.mxu0 %v864
    %v1074 = vpop.f32.mrf.mxu0
    %v1075 = vadd.f32 %v901, %v1074
    %v1076 = vpop.f32.mrf.mxu0
    %1077 = vdwg.mxu0
    %1078 = vmatpush.bf16.msra.mxu0 %v1031
    %1079 = vmatpush.bf16.msra.mxu0 %v1029
    %1080 = vmatpush.bf16.msra.mxu0 %v1027
    %1081 = vmatpush.bf16.msra.mxu0 %v1025
    %1082 = vmatpush.bf16.msra.mxu0 %v1023
    %1083 = vmatpush.bf16.msra.mxu0 %v1021
    %1084 = vmatpush.bf16.msra.mxu0 %v1019
    %1085 = vmatpush.bf16.msra.mxu0 %v1017
    %1086 = vmatmul.bf16.gmra.mxu0 %v865
    %v1087 = vpop.f32.mrf.mxu0
    %v1088 = vadd.f32 %v1075, %v1087
    %v1089 = vpop.f32.mrf.mxu0
    %1090 = vdwg.mxu0
    %1091 = vmatpush.bf16.msra.mxu0 %v1016
    %1092 = vmatpush.bf16.msra.mxu0 %v1014
    %1093 = vmatpush.bf16.msra.mxu0 %v1012
    %1094 = vmatpush.bf16.msra.mxu0 %v1010
    %1095 = vmatpush.bf16.msra.mxu0 %v1008
    %1096 = vmatpush.bf16.msra.mxu0 %v1006
    %1097 = vmatpush.bf16.msra.mxu0 %v1004
    %1098 = vmatpush.bf16.msra.mxu0 %v1002
    %1099 = vmatmul.bf16.gmra.mxu0 %v864
    %v1100 = vpop.f32.mrf.mxu0
    %v1101 = vadd.f32 %v902, %v1100
    %v1102 = vpop.f32.mrf.mxu0
    %1103 = vdwg.mxu0
    %1104 = vmatpush.bf16.msra.mxu0 %v1032
    %1105 = vmatpush.bf16.msra.mxu0 %v1030
    %1106 = vmatpush.bf16.msra.mxu0 %v1028
    %1107 = vmatpush.bf16.msra.mxu0 %v1026
    %1108 = vmatpush.bf16.msra.mxu0 %v1024
    %1109 = vmatpush.bf16.msra.mxu0 %v1022
    %1110 = vmatpush.bf16.msra.mxu0 %v1020
    %1111 = vmatpush.bf16.msra.mxu0 %v1018
    %1112 = vmatmul.bf16.gmra.mxu0 %v865
    %v1113 = vpop.f32.mrf.mxu0
    %v1114 = vadd.f32 %v1101, %v1113
    %v1115 = vpop.f32.mrf.mxu0
    %1116 = vdwg.mxu0
    %v1117 = vmul.f32 %v1088, 0.01
    %v1118 = vmul.f32 %v1114, 0.01
    %v1119 = vmax.f32 %v1088, %v1117
    %v1120 = vmax.f32 %v1114, %v1118
    %v1121 = vpack.c.bf16 %v1119, %v1119
    %v1122 = vpack.c.bf16 %v1120, %v1120
    %v1123 = vld [vmem:[%s7] sm:$0xff]
    %v1124 = vld [vmem:[%s7 + $0x8] sm:$0xff]
    %v1125 = vld [vmem:[%s7 + $0x10] sm:$0xff]
    %v1126 = vld [vmem:[%s7 + $0x18] sm:$0xff]
    %v1127 = vld [vmem:[%s7 + $0x20] sm:$0xff]
    %v1128 = vld [vmem:[%s7 + $0x28] sm:$0xff]
    %v1129 = vld [vmem:[%s7 + $0x30] sm:$0xff]
    %v1130 = vld [vmem:[%s7 + $0x38] sm:$0xff]
    %v1131 = vld [vmem:[%s7 + $0x40] sm:$0xff]
    %v1132 = vld [vmem:[%s7 + $0x48] sm:$0xff]
    %v1133 = vld [vmem:[%s7 + $0x50] sm:$0xff]
    %v1134 = vld [vmem:[%s7 + $0x58] sm:$0xff]
    %v1135 = vld [vmem:[%s7 + $0x60] sm:$0xff]
    %v1136 = vld [vmem:[%s7 + $0x68] sm:$0xff]
    %v1137 = vld [vmem:[%s7 + $0x70] sm:$0xff]
    %v1138 = vld [vmem:[%s7 + $0x78] sm:$0xff]
    %v1139 = vld [vmem:[%s7 + $0x80] sm:$0xff]
    %v1140 = vld [vmem:[%s7 + $0x88] sm:$0xff]
    %v1141 = vld [vmem:[%s7 + $0x90] sm:$0xff]
    %v1142 = vld [vmem:[%s7 + $0x98] sm:$0xff]
    %v1143 = vld [vmem:[%s7 + $0xa0] sm:$0xff]
    %v1144 = vld [vmem:[%s7 + $0xa8] sm:$0xff]
    %v1145 = vld [vmem:[%s7 + $0xb0] sm:$0xff]
    %v1146 = vld [vmem:[%s7 + $0xb8] sm:$0xff]
    %v1147 = vld [vmem:[%s7 + $0xc0] sm:$0xff]
    %v1148 = vld [vmem:[%s7 + $0xc8] sm:$0xff]
    %v1149 = vld [vmem:[%s7 + $0xd0] sm:$0xff]
    %v1150 = vld [vmem:[%s7 + $0xd8] sm:$0xff]
    %v1151 = vld [vmem:[%s7 + $0xe0] sm:$0xff]
    %v1152 = vld [vmem:[%s7 + $0xe8] sm:$0xff]
    %v1153 = vld [vmem:[%s7 + $0xf0] sm:$0xff]
    %v1154 = vld [vmem:[%s7 + $0xf8] sm:$0xff]
    %s1155 = scalar_lea.vmem [#allocation10], 2
    %v1156 = vld [vmem:[%s1155] ss:$4 sm:$0x3]
    %v1158 = vperm.slane %v1156, 0
    %v1159 = vperm.slane %v1156, 1
    %v1194 = vunpack.c.l.b16 %v1123
    %v1195 = vunpack.c.h.b16 %v1123
    %v1196 = vunpack.c.l.b16 %v1124
    %v1197 = vunpack.c.h.b16 %v1124
    %v1198 = vunpack.c.l.b16 %v1125
    %v1199 = vunpack.c.h.b16 %v1125
    %v1200 = vunpack.c.l.b16 %v1126
    %v1201 = vunpack.c.h.b16 %v1126
    %v1202 = vunpack.c.l.b16 %v1127
    %v1203 = vunpack.c.h.b16 %v1127
    %v1204 = vunpack.c.l.b16 %v1128
    %v1205 = vunpack.c.h.b16 %v1128
    %v1206 = vunpack.c.l.b16 %v1129
    %v1207 = vunpack.c.h.b16 %v1129
    %v1208 = vunpack.c.l.b16 %v1130
    %v1209 = vunpack.c.h.b16 %v1130
    %v1210 = vunpack.c.l.b16 %v1131
    %v1211 = vunpack.c.h.b16 %v1131
    %v1212 = vunpack.c.l.b16 %v1132
    %v1213 = vunpack.c.h.b16 %v1132
    %v1214 = vunpack.c.l.b16 %v1133
    %v1215 = vunpack.c.h.b16 %v1133
    %v1216 = vunpack.c.l.b16 %v1134
    %v1217 = vunpack.c.h.b16 %v1134
    %v1218 = vunpack.c.l.b16 %v1135
    %v1219 = vunpack.c.h.b16 %v1135
    %v1220 = vunpack.c.l.b16 %v1136
    %v1221 = vunpack.c.h.b16 %v1136
    %v1222 = vunpack.c.l.b16 %v1137
    %v1223 = vunpack.c.h.b16 %v1137
    %v1224 = vunpack.c.l.b16 %v1138
    %v1225 = vunpack.c.h.b16 %v1138
    %v1226 = vunpack.c.l.b16 %v1139
    %v1227 = vunpack.c.h.b16 %v1139
    %v1228 = vunpack.c.l.b16 %v1140
    %v1229 = vunpack.c.h.b16 %v1140
    %v1230 = vunpack.c.l.b16 %v1141
    %v1231 = vunpack.c.h.b16 %v1141
    %v1232 = vunpack.c.l.b16 %v1142
    %v1233 = vunpack.c.h.b16 %v1142
    %v1234 = vunpack.c.l.b16 %v1143
    %v1235 = vunpack.c.h.b16 %v1143
    %v1236 = vunpack.c.l.b16 %v1144
    %v1237 = vunpack.c.h.b16 %v1144
    %v1238 = vunpack.c.l.b16 %v1145
    %v1239 = vunpack.c.h.b16 %v1145
    %v1240 = vunpack.c.l.b16 %v1146
    %v1241 = vunpack.c.h.b16 %v1146
    %v1242 = vunpack.c.l.b16 %v1147
    %v1243 = vunpack.c.h.b16 %v1147
    %v1244 = vunpack.c.l.b16 %v1148
    %v1245 = vunpack.c.h.b16 %v1148
    %v1246 = vunpack.c.l.b16 %v1149
    %v1247 = vunpack.c.h.b16 %v1149
    %v1248 = vunpack.c.l.b16 %v1150
    %v1249 = vunpack.c.h.b16 %v1150
    %v1250 = vunpack.c.l.b16 %v1151
    %v1251 = vunpack.c.h.b16 %v1151
    %v1252 = vunpack.c.l.b16 %v1152
    %v1253 = vunpack.c.h.b16 %v1152
    %v1254 = vunpack.c.l.b16 %v1153
    %v1255 = vunpack.c.h.b16 %v1153
    %v1256 = vunpack.c.l.b16 %v1154
    %v1257 = vunpack.c.h.b16 %v1154
    %v1258 = vpack.c.b16 %v1196, %v1194
    %v1259 = vpack.c.b16 %v1197, %v1195
    %v1260 = vpack.c.b16 %v1200, %v1198
    %v1261 = vpack.c.b16 %v1201, %v1199
    %v1262 = vpack.c.b16 %v1204, %v1202
    %v1263 = vpack.c.b16 %v1205, %v1203
    %v1264 = vpack.c.b16 %v1208, %v1206
    %v1265 = vpack.c.b16 %v1209, %v1207
    %v1266 = vpack.c.b16 %v1212, %v1210
    %v1267 = vpack.c.b16 %v1213, %v1211
    %v1268 = vpack.c.b16 %v1216, %v1214
    %v1269 = vpack.c.b16 %v1217, %v1215
    %v1270 = vpack.c.b16 %v1220, %v1218
    %v1271 = vpack.c.b16 %v1221, %v1219
    %v1272 = vpack.c.b16 %v1224, %v1222
    %v1273 = vpack.c.b16 %v1225, %v1223
    %v1274 = vpack.c.b16 %v1228, %v1226
    %v1275 = vpack.c.b16 %v1229, %v1227
    %v1276 = vpack.c.b16 %v1232, %v1230
    %v1277 = vpack.c.b16 %v1233, %v1231
    %v1278 = vpack.c.b16 %v1236, %v1234
    %v1279 = vpack.c.b16 %v1237, %v1235
    %v1280 = vpack.c.b16 %v1240, %v1238
    %v1281 = vpack.c.b16 %v1241, %v1239
    %v1282 = vpack.c.b16 %v1244, %v1242
    %v1283 = vpack.c.b16 %v1245, %v1243
    %v1284 = vpack.c.b16 %v1248, %v1246
    %v1285 = vpack.c.b16 %v1249, %v1247
    %v1286 = vpack.c.b16 %v1252, %v1250
    %v1287 = vpack.c.b16 %v1253, %v1251
    %v1288 = vpack.c.b16 %v1256, %v1254
    %v1289 = vpack.c.b16 %v1257, %v1255
    %1322 = vmatpush.bf16.msra.mxu0 %v1272
    %1323 = vmatpush.bf16.msra.mxu0 %v1270
    %1324 = vmatpush.bf16.msra.mxu0 %v1268
    %1325 = vmatpush.bf16.msra.mxu0 %v1266
    %1326 = vmatpush.bf16.msra.mxu0 %v1264
    %1327 = vmatpush.bf16.msra.mxu0 %v1262
    %1328 = vmatpush.bf16.msra.mxu0 %v1260
    %1329 = vmatpush.bf16.msra.mxu0 %v1258
    %1330 = vmatmul.bf16.gmra.mxu0 %v1121
    %v1331 = vpop.f32.mrf.mxu0
    %v1332 = vadd.f32 %v1158, %v1331
    %v1333 = vpop.f32.mrf.mxu0
    %1334 = vdwg.mxu0
    %1335 = vmatpush.bf16.msra.mxu0 %v1288
    %1336 = vmatpush.bf16.msra.mxu0 %v1286
    %1337 = vmatpush.bf16.msra.mxu0 %v1284
    %1338 = vmatpush.bf16.msra.mxu0 %v1282
    %1339 = vmatpush.bf16.msra.mxu0 %v1280
    %1340 = vmatpush.bf16.msra.mxu0 %v1278
    %1341 = vmatpush.bf16.msra.mxu0 %v1276
    %1342 = vmatpush.bf16.msra.mxu0 %v1274
    %1343 = vmatmul.bf16.gmra.mxu0 %v1122
    %v1344 = vpop.f32.mrf.mxu0
    %v1345 = vadd.f32 %v1332, %v1344
    %v1346 = vpop.f32.mrf.mxu0
    %1347 = vdwg.mxu0
    %1348 = vmatpush.bf16.msra.mxu0 %v1273
    %1349 = vmatpush.bf16.msra.mxu0 %v1271
    %1350 = vmatpush.bf16.msra.mxu0 %v1269
    %1351 = vmatpush.bf16.msra.mxu0 %v1267
    %1352 = vmatpush.bf16.msra.mxu0 %v1265
    %1353 = vmatpush.bf16.msra.mxu0 %v1263
    %1354 = vmatpush.bf16.msra.mxu0 %v1261
    %1355 = vmatpush.bf16.msra.mxu0 %v1259
    %1356 = vmatmul.bf16.gmra.mxu0 %v1121
    %v1357 = vpop.f32.mrf.mxu0
    %v1358 = vadd.f32 %v1159, %v1357
    %v1359 = vpop.f32.mrf.mxu0
    %1360 = vdwg.mxu0
    %1361 = vmatpush.bf16.msra.mxu0 %v1289
    %1362 = vmatpush.bf16.msra.mxu0 %v1287
    %1363 = vmatpush.bf16.msra.mxu0 %v1285
    %1364 = vmatpush.bf16.msra.mxu0 %v1283
    %1365 = vmatpush.bf16.msra.mxu0 %v1281
    %1366 = vmatpush.bf16.msra.mxu0 %v1279
    %1367 = vmatpush.bf16.msra.mxu0 %v1277
    %1368 = vmatpush.bf16.msra.mxu0 %v1275
    %1369 = vmatmul.bf16.gmra.mxu0 %v1122
    %v1370 = vpop.f32.mrf.mxu0
    %v1371 = vadd.f32 %v1358, %v1370
    %v1372 = vpop.f32.mrf.mxu0
    %1373 = vdwg.mxu0
    %v1374 = vmul.f32 %v1345, 0.01
    %v1375 = vmul.f32 %v1371, 0.01
    %v1376 = vmax.f32 %v1345, %v1374
    %v1377 = vmax.f32 %v1371, %v1375
    %v1378 = vpack.c.bf16 %v1376, %v1376
    %v1379 = vpack.c.bf16 %v1377, %v1377
    %v1380 = vld [vmem:[%s8] sm:$0xf]
    %v1381 = vld [vmem:[%s8 + $0x4] sm:$0xf]
    %v1382 = vld [vmem:[%s8 + $0x8] sm:$0xf]
    %v1383 = vld [vmem:[%s8 + $0xc] sm:$0xf]
    %v1384 = vld [vmem:[%s8 + $0x10] sm:$0xf]
    %v1385 = vld [vmem:[%s8 + $0x14] sm:$0xf]
    %v1386 = vld [vmem:[%s8 + $0x18] sm:$0xf]
    %v1387 = vld [vmem:[%s8 + $0x1c] sm:$0xf]
    %v1388 = vld [vmem:[%s8 + $0x20] sm:$0xf]
    %v1389 = vld [vmem:[%s8 + $0x24] sm:$0xf]
    %v1390 = vld [vmem:[%s8 + $0x28] sm:$0xf]
    %v1391 = vld [vmem:[%s8 + $0x2c] sm:$0xf]
    %v1392 = vld [vmem:[%s8 + $0x30] sm:$0xf]
    %v1393 = vld [vmem:[%s8 + $0x34] sm:$0xf]
    %v1394 = vld [vmem:[%s8 + $0x38] sm:$0xf]
    %v1395 = vld [vmem:[%s8 + $0x3c] sm:$0xf]
    %v1396 = vld [vmem:[%s8 + $0x40] sm:$0xf]
    %v1397 = vld [vmem:[%s8 + $0x44] sm:$0xf]
    %v1398 = vld [vmem:[%s8 + $0x48] sm:$0xf]
    %v1399 = vld [vmem:[%s8 + $0x4c] sm:$0xf]
    %v1400 = vld [vmem:[%s8 + $0x50] sm:$0xf]
    %v1401 = vld [vmem:[%s8 + $0x54] sm:$0xf]
    %v1402 = vld [vmem:[%s8 + $0x58] sm:$0xf]
    %v1403 = vld [vmem:[%s8 + $0x5c] sm:$0xf]
    %v1404 = vld [vmem:[%s8 + $0x60] sm:$0xf]
    %v1405 = vld [vmem:[%s8 + $0x64] sm:$0xf]
    %v1406 = vld [vmem:[%s8 + $0x68] sm:$0xf]
    %v1407 = vld [vmem:[%s8 + $0x6c] sm:$0xf]
    %v1408 = vld [vmem:[%s8 + $0x70] sm:$0xf]
    %v1409 = vld [vmem:[%s8 + $0x74] sm:$0xf]
    %v1410 = vld [vmem:[%s8 + $0x78] sm:$0xf]
    %v1411 = vld [vmem:[%s8 + $0x7c] sm:$0xf]
    %v1412 = vld [vmem:[#allocation10 + $0x3] sm:$0x1]
    %v1413 = vperm.slane %v1412, 0
    %v1446 = vunpack.c.l.b16 %v1380
    %v1447 = vunpack.c.l.b16 %v1381
    %v1448 = vunpack.c.l.b16 %v1382
    %v1449 = vunpack.c.l.b16 %v1383
    %v1450 = vunpack.c.l.b16 %v1384
    %v1451 = vunpack.c.l.b16 %v1385
    %v1452 = vunpack.c.l.b16 %v1386
    %v1453 = vunpack.c.l.b16 %v1387
    %v1454 = vunpack.c.l.b16 %v1388
    %v1455 = vunpack.c.l.b16 %v1389
    %v1456 = vunpack.c.l.b16 %v1390
    %v1457 = vunpack.c.l.b16 %v1391
    %v1458 = vunpack.c.l.b16 %v1392
    %v1459 = vunpack.c.l.b16 %v1393
    %v1460 = vunpack.c.l.b16 %v1394
    %v1461 = vunpack.c.l.b16 %v1395
    %v1462 = vunpack.c.l.b16 %v1396
    %v1463 = vunpack.c.l.b16 %v1397
    %v1464 = vunpack.c.l.b16 %v1398
    %v1465 = vunpack.c.l.b16 %v1399
    %v1466 = vunpack.c.l.b16 %v1400
    %v1467 = vunpack.c.l.b16 %v1401
    %v1468 = vunpack.c.l.b16 %v1402
    %v1469 = vunpack.c.l.b16 %v1403
    %v1470 = vunpack.c.l.b16 %v1404
    %v1471 = vunpack.c.l.b16 %v1405
    %v1472 = vunpack.c.l.b16 %v1406
    %v1473 = vunpack.c.l.b16 %v1407
    %v1474 = vunpack.c.l.b16 %v1408
    %v1475 = vunpack.c.l.b16 %v1409
    %v1476 = vunpack.c.l.b16 %v1410
    %v1477 = vunpack.c.l.b16 %v1411
    %v1478 = vpack.c.b16 %v1447, %v1446
    %v1479 = vpack.c.b16 %v1449, %v1448
    %v1480 = vpack.c.b16 %v1451, %v1450
    %v1481 = vpack.c.b16 %v1453, %v1452
    %v1482 = vpack.c.b16 %v1455, %v1454
    %v1483 = vpack.c.b16 %v1457, %v1456
    %v1484 = vpack.c.b16 %v1459, %v1458
    %v1485 = vpack.c.b16 %v1461, %v1460
    %v1486 = vpack.c.b16 %v1463, %v1462
    %v1487 = vpack.c.b16 %v1465, %v1464
    %v1488 = vpack.c.b16 %v1467, %v1466
    %v1489 = vpack.c.b16 %v1469, %v1468
    %v1490 = vpack.c.b16 %v1471, %v1470
    %v1491 = vpack.c.b16 %v1473, %v1472
    %v1492 = vpack.c.b16 %v1475, %v1474
    %v1493 = vpack.c.b16 %v1477, %v1476
    %1510 = vmatpush.bf16.msra.mxu0 %v1485
    %1511 = vmatpush.bf16.msra.mxu0 %v1484
    %1512 = vmatpush.bf16.msra.mxu0 %v1483
    %1513 = vmatpush.bf16.msra.mxu0 %v1482
    %1514 = vmatpush.bf16.msra.mxu0 %v1481
    %1515 = vmatpush.bf16.msra.mxu0 %v1480
    %1516 = vmatpush.bf16.msra.mxu0 %v1479
    %1517 = vmatpush.bf16.msra.mxu0 %v1478
    %1518 = vmatmul.bf16.gmra.mxu0 %v1378
    %v1519 = vpop.f32.mrf.mxu0
    %v1520 = vadd.f32 %v1413, %v1519
    %v1521 = vpop.f32.mrf.mxu0
    %1522 = vdwg.mxu0
    %1523 = vmatpush.bf16.msra.mxu0 %v1493
    %1524 = vmatpush.bf16.msra.mxu0 %v1492
    %1525 = vmatpush.bf16.msra.mxu0 %v1491
    %1526 = vmatpush.bf16.msra.mxu0 %v1490
    %1527 = vmatpush.bf16.msra.mxu0 %v1489
    %1528 = vmatpush.bf16.msra.mxu0 %v1488
    %1529 = vmatpush.bf16.msra.mxu0 %v1487
    %1530 = vmatpush.bf16.msra.mxu0 %v1486
    %1531 = vmatmul.bf16.gmra.mxu0 %v1379
    %v1532 = vpop.f32.mrf.mxu0
    %v1533 = vadd.f32 %v1520, %v1532
    %v1534 = vpop.f32.mrf.mxu0
    %1535 = vdwg.mxu0
    %1536 = vst [vmem:[#allocation11] sm:$0x3] %v1533
    // Predicated region
    $region58: #{tpu_custom_call.1} parent=1 // pred_check
      _
    $region59: #{tpu_custom_call.1} parent=1 // pred_check_branch
      %1538 = sbr.rel (0) target = $region61
    $region60: #{tpu_custom_call.1} parent=1 // pred_region
      %1540 = vsyncadd [#allocation4], 0
      %s1542 = sshll.u32 [#allocation11], 4
      %s1543 = int_to_ptr.vmem [resolvable:$true] %s1542
      %s1544 = sshll.u32 %s9, 4
      %s1545 = int_to_ptr.hbm [resolvable:$true] %s1544
      %1547 = dma.vmem_to_hbm [thread:$0]  %s1543, 32, %s1545, [#allocation4]
    $region61: #{tpu_custom_call.1} parent=1 // pred_fallthru
      _
    // Predicated region
    $region62: #{tpu_custom_call.1} parent=1 // pred_check
      _
    $region63: #{tpu_custom_call.1} parent=1 // pred_check_branch
      %1549 = sbr.rel (0) target = $region65
    $region64: #{tpu_custom_call.1} parent=1 // pred_region
      %1551 = dma.done [#allocation4], 32
    $region65: #{tpu_custom_call.1} parent=1 // pred_fallthru
      _
    %1552 = vsyncpa [#allocation3], 1
    %1553 = vsyncpa [#allocation6], 1
    %1554 = vsyncpa [#allocation9], 1
    %1555 = vsyncpa [#allocation4], 1

</llo_original>
